<compile_context>
chip_gen: v5e
topology: v5e:2x2
jax: 0.10.0
libtpu: 0.0.40
codegen_flags: <defaults>
</compile_context>

<pallas_src>
import functools
import math

import jax
import jax.numpy as jnp
from jax.experimental import pallas as pl
from jax.experimental.pallas import tpu as pltpu

LN_EPS = 1e-5  # torch.nn.LayerNorm default


def _lewin_row_kernel(x_ref, wqkv_ref, bqkv_ref, wp_ref, bp_ref, o_ref,
                      *, num_heads, win, nww):
    """Fused LayerNorm + window MHSA + out-proj for one (batch, window-row)."""
    C = wp_ref.shape[0]
    N = win * win
    hd = C // num_heads
    W = nww * win

    # (1, win, W*C) -> (win, W*C): dropping the leading unit dim is free.
    xw = x_ref[...].reshape(win, W * C)

    # Gather tokens into (W*win, C): piece p (= global image column) supplies
    # rows [p*win, (p+1)*win), so window j owns the contiguous row range
    # [j*N, (j+1)*N). The within-window token order differs from the reference
    # (column-major vs row-major), which is fine: per-token attention output
    # depends only on the *set* of tokens in its window, and the inverse
    # mapping is applied when writing the output back.
    x = jnp.concatenate([xw[:, p * C:(p + 1) * C] for p in range(W)], axis=0)

    # LayerNorm statistics only (gamma/beta folded into wqkv/bqkv by wrapper).
    mean = jnp.mean(x, axis=-1, keepdims=True)
    xc = x - mean
    var = jnp.mean(xc * xc, axis=-1, keepdims=True)
    xh = xc * jax.lax.rsqrt(var + LN_EPS)

    # Fused QKV projection: bf16 inputs, f32 accumulation, single MXU dot.
    qkv = jnp.dot(xh.astype(jnp.bfloat16), wqkv_ref[...],
                  preferred_element_type=jnp.float32) + bqkv_ref[...]
    q, k, v = qkv[:, :C], qkv[:, C:2 * C], qkv[:, 2 * C:]

    # Per-window, per-head attention (scale * rescale already folded into q).
    win_outs = []
    for j in range(nww):
        base = j * N
        head_outs = []
        for h in range(num_heads):
            lo = h * hd
            qh = q[base:base + N, lo:lo + hd].astype(jnp.bfloat16)
            kh = k[base:base + N, lo:lo + hd].astype(jnp.bfloat16)
            vh = v[base:base + N, lo:lo + hd].astype(jnp.bfloat16)
            # logits = q_h @ k_h^T -> (N, N), f32 accumulation.
            s = jax.lax.dot_general(qh, kh, (((1,), (1,)), ((), ())),
                                    preferred_element_type=jnp.float32)
            s = s - jnp.max(s, axis=-1, keepdims=True)
            p_ = jnp.exp(s)
            p_ = p_ * pl.reciprocal(jnp.sum(p_, axis=-1, keepdims=True),
                                    approx=True)
            head_outs.append(jnp.dot(p_.astype(jnp.bfloat16), vh,
                                     preferred_element_type=jnp.float32))
        win_outs.append(jnp.concatenate(head_outs, axis=1))     # (N, C)
    att = jnp.concatenate(win_outs, axis=0)                     # (W*win, C)

    # Single K=C output projection.
    y = jnp.dot(att.astype(jnp.bfloat16), wp_ref[...],
                preferred_element_type=jnp.float32) + bp_ref[...]

    # Scatter tokens back to the lane-dense layout and do one full-width store.
    yw = jnp.concatenate([y[p * win:(p + 1) * win, :] for p in range(W)], axis=1)
    o_ref[...] = yw.reshape(1, win, W * C).astype(o_ref.dtype)


def _const_spec(shape):
    # Whole (small) weight array as one block with a constant index map: DMA'd
    # once and kept resident in VMEM across the grid.
    return pl.BlockSpec(shape, lambda b, i: (0,) * len(shape))


def basic_uformer_layer_forward(x, params, *, input_resolution, num_heads, win_size):
    """x: (B, L, C) with L = H*W. Returns (B, H, W, C), like the PyTorch module."""
    B, L, C = x.shape
    H, W = input_resolution
    assert L == H * W, "sequence length must equal H*W"
    # LeWinTransformerBlock shrinks the window when the resolution is small.
    win = min(win_size, H, W)
    assert H % win == 0 and W % win == 0, "window_partition requires divisibility"
    assert C % num_heads == 0
    hd = C // num_heads
    scale = float(hd) ** (-0.53)

    gamma = params["gamma"].astype(jnp.float32)
    beta = params["beta"].astype(jnp.float32)
    # softmax(((q*scale) @ k^T) * rescale): both scalars commute with the
    # matmul, so fold scale*rescale into the q projection.
    ls = (scale * params["rescale"].reshape(())).astype(jnp.float32)

    wq = params["wq"].astype(jnp.float32)
    bq = params["bq"].astype(jnp.float32)
    wkv = params["wkv"].astype(jnp.float32)
    bkv = params["bkv"].astype(jnp.float32)
    wk, wv = wkv[:, :C], wkv[:, C:]          # to_kv output channels: [k | v]
    bk, bv = bkv[:C], bkv[C:]

    # Fold LayerNorm affine into the projections:
    #   (x_hat*gamma + beta) @ W + b == x_hat @ (diag(gamma) W) + (beta @ W + b)
    hp = "highest"
    wq_f = (gamma[:, None] * wq) * ls
    bq_f = (jnp.dot(beta, wq, precision=hp) + bq) * ls
    wk_f = gamma[:, None] * wk
    bk_f = jnp.dot(beta, wk, precision=hp) + bk
    wv_f = gamma[:, None] * wv
    bv_f = jnp.dot(beta, wv, precision=hp) + bv

    wqkv = jnp.concatenate([wq_f, wk_f, wv_f], axis=1).astype(jnp.bfloat16)  # (C, 3C)
    bqkv = jnp.concatenate([bq_f, bk_f, bv_f]).reshape(1, 3 * C)             # f32
    wp = params["wp"].astype(jnp.bfloat16)                                   # (C, C)
    bp = params["bp"].astype(jnp.float32).reshape(1, C)

    nwh, nww = H // win, W // win
    # Free row-major view: (B, L, C) -> (B, H, W*C). Blocks are lane-dense
    # (last dim == full array dim, multiple of 128 in the demo config).
    x3 = x.reshape(B, H, W * C)

    kernel = functools.partial(_lewin_row_kernel,
                               num_heads=num_heads, win=win, nww=nww)
    row_spec = pl.BlockSpec((1, win, W * C), lambda b, i: (b, i, 0))

    out3 = pl.pallas_call(
        kernel,
        out_shape=jax.ShapeDtypeStruct((B, H, W * C), x.dtype),
        grid_spec=pltpu.PrefetchScalarGridSpec(
            num_scalar_prefetch=0,
            grid=(B, nwh),
            in_specs=[
                row_spec,
                _const_spec((C, 3 * C)),   # wqkv (bf16)
                _const_spec((1, 3 * C)),   # bqkv (f32)
                _const_spec((C, C)),       # wp   (bf16)
                _const_spec((1, C)),       # bp   (f32)
            ],
            out_specs=row_spec,
        ),
        compiler_params=pltpu.CompilerParams(
            dimension_semantics=("parallel", "parallel"),
        ),
    )(x3, wqkv, bqkv, wp, bp)
    return out3.reshape(B, H, W, C)


def reference_forward(x, params, *, input_resolution, num_heads, win_size):
    """Pure-JAX mirror of BasicUformerLayer.forward (depth=1, shift=0), f32."""
    B, L, C = x.shape
    H, W = input_resolution
    win = min(win_size, H, W)
    hd = C // num_heads
    scale = float(hd) ** (-0.53)
    hp = jax.lax.Precision.HIGHEST

    xr = x.reshape(B, H, W, C)
    mean = xr.mean(-1, keepdims=True)
    var = ((xr - mean) ** 2).mean(-1, keepdims=True)
    xn = (xr - mean) / jnp.sqrt(var + LN_EPS) * params["gamma"] + params["beta"]

    nwh, nww = H // win, W // win
    xw = xn.reshape(B, nwh, win, nww, win, C).transpose(0, 1, 3, 2, 4, 5)
    xw = xw.reshape(-1, win * win, C)                       # (B_, N, C)
    Bw, N, _ = xw.shape

    q = jnp.einsum("bnc,cd->bnd", xw, params["wq"], precision=hp) + params["bq"]
    kv = jnp.einsum("bnc,cd->bnd", xw, params["wkv"], precision=hp) + params["bkv"]
    k, v = kv[..., :C], kv[..., C:]

    def heads(t):  # (B_, N, C) -> (B_, heads, N, hd)
        return t.reshape(Bw, N, num_heads, hd).transpose(0, 2, 1, 3)

    qh, kh, vh = heads(q) * scale, heads(k), heads(v)
    attn = jnp.einsum("bhnd,bhmd->bhnm", qh, kh, precision=hp)
    attn = attn * params["rescale"].reshape(())
    attn = jax.nn.softmax(attn, axis=-1)
    out = jnp.einsum("bhnm,bhmd->bhnd", attn, vh, precision=hp)
    out = out.transpose(0, 2, 1, 3).reshape(Bw, N, C)
    out = jnp.einsum("bnc,cd->bnd", out, params["wp"], precision=hp) + params["bp"]

    out = out.reshape(B, nwh, nww, win, win, C).transpose(0, 1, 3, 2, 4, 5)
    return out.reshape(B, H, W, C)


def init_params(key, dim, num_heads):
    """Deterministic synthetic params matching the module's parameter set."""
    ks = jax.random.split(key, 8)
    s = 1.0 / math.sqrt(dim)
    return {
        "gamma": 1.0 + 0.1 * jax.random.normal(ks[0], (dim,), jnp.float32),
        "beta": 0.1 * jax.random.normal(ks[1], (dim,), jnp.float32),
        "wq": jax.random.uniform(ks[2], (dim, dim), jnp.float32, -s, s),
        "bq": jax.random.uniform(ks[3], (dim,), jnp.float32, -s, s),
        "wkv": jax.random.uniform(ks[4], (dim, 2 * dim), jnp.float32, -s, s),
        "bkv": jax.random.uniform(ks[5], (2 * dim,), jnp.float32, -s, s),
        "wp": jax.random.uniform(ks[6], (dim, dim), jnp.float32, -s, s),
        "bp": jax.random.uniform(ks[7], (dim,), jnp.float32, -s, s),
        "rescale": jnp.full((1, 1, 1), 1.25, jnp.float32),  # nn.Parameter ones(1,1,1)
    }


if __name__ == "__main__":
    # Small shapes consistent with the module: dim=32, 4 heads, 16x16 tokens,
    # window 8 -> 2x2 windows/image, batch 2.
    B, C = 2, 32
    H = W = 16
    num_heads = 4
    win_size = 8
    L = H * W

    key = jax.random.PRNGKey(0)
    kx, kp = jax.random.split(key)
    x = jax.random.normal(kx, (B, L, C), jnp.float32)
    params = init_params(kp, C, num_heads)

    out = basic_uformer_layer_forward(
        x, params, input_resolution=(H, W), num_heads=num_heads, win_size=win_size)
    out = jax.block_until_ready(out)

    ref = reference_forward(
        x, params, input_resolution=(H, W), num_heads=num_heads, win_size=win_size)
    assert out.shape == (B, H, W, C)
    # bf16-input / f32-accumulate matmuls + approx reciprocal => loosened tol.
    err = float(jnp.max(jnp.abs(out - ref)))
    assert jnp.allclose(out, ref, atol=2e-2, rtol=2e-2), err
    print("KERNEL_OK")
</pallas_src>

<mosaic_0001>
module attributes {stable_mosaic.version = 11 : i64} {
  func.func @_lewin_row_kernel(%arg0: i32, %arg1: i32, %arg2: memref<1x8x512xf32, #tpu.memory_space<vmem>>, %arg3: memref<32x96xbf16, #tpu.memory_space<vmem>>, %arg4: memref<1x96xf32, #tpu.memory_space<vmem>>, %arg5: memref<32x32xbf16, #tpu.memory_space<vmem>>, %arg6: memref<1x32xf32, #tpu.memory_space<vmem>>, %arg7: memref<1x8x512xf32, #tpu.memory_space<vmem>>) attributes {dimension_semantics = [#tpu.dimension_semantics<parallel>, #tpu.dimension_semantics<parallel>], iteration_bounds = array<i64: 2, 2>, scalar_prefetch = 0 : i64, scratch_operands = 0 : i64, tpu.core_type = #tpu.core_type<tc>, window_params = [{transform_indices = @transform_0, window_bounds = array<i64: 1, 8, 512>}, {pipeline_mode = #tpu.pipeline_mode<synchronous>, transform_indices = @transform_1, window_bounds = array<i64: 32, 96>}, {pipeline_mode = #tpu.pipeline_mode<synchronous>, transform_indices = @transform_2, window_bounds = array<i64: 1, 96>}, {pipeline_mode = #tpu.pipeline_mode<synchronous>, transform_indices = @transform_3, window_bounds = array<i64: 32, 32>}, {pipeline_mode = #tpu.pipeline_mode<synchronous>, transform_indices = @transform_4, window_bounds = array<i64: 1, 32>}, {transform_indices = @transform_5, window_bounds = array<i64: 1, 8, 512>}]} {
    %c0 = arith.constant 0 : index
    %c0_0 = arith.constant 0 : index
    %c0_1 = arith.constant 0 : index
    %0 = vector.load %arg2[%c0, %c0_0, %c0_1] : memref<1x8x512xf32, #tpu.memory_space<vmem>>, vector<1x8x512xf32>
    %1 = vector.shape_cast %0 : vector<1x8x512xf32> to vector<8x512xf32>
    %2 = vector.extract_strided_slice %1 {offsets = [0, 0], sizes = [8, 32], strides = [1, 1]} : vector<8x512xf32> to vector<8x32xf32>
    %3 = vector.extract_strided_slice %1 {offsets = [0, 32], sizes = [8, 32], strides = [1, 1]} : vector<8x512xf32> to vector<8x32xf32>
    %4 = vector.extract_strided_slice %1 {offsets = [0, 64], sizes = [8, 32], strides = [1, 1]} : vector<8x512xf32> to vector<8x32xf32>
    %5 = vector.extract_strided_slice %1 {offsets = [0, 96], sizes = [8, 32], strides = [1, 1]} : vector<8x512xf32> to vector<8x32xf32>
    %6 = vector.extract_strided_slice %1 {offsets = [0, 128], sizes = [8, 32], strides = [1, 1]} : vector<8x512xf32> to vector<8x32xf32>
    %7 = vector.extract_strided_slice %1 {offsets = [0, 160], sizes = [8, 32], strides = [1, 1]} : vector<8x512xf32> to vector<8x32xf32>
    %8 = vector.extract_strided_slice %1 {offsets = [0, 192], sizes = [8, 32], strides = [1, 1]} : vector<8x512xf32> to vector<8x32xf32>
    %9 = vector.extract_strided_slice %1 {offsets = [0, 224], sizes = [8, 32], strides = [1, 1]} : vector<8x512xf32> to vector<8x32xf32>
    %10 = vector.extract_strided_slice %1 {offsets = [0, 256], sizes = [8, 32], strides = [1, 1]} : vector<8x512xf32> to vector<8x32xf32>
    %11 = vector.extract_strided_slice %1 {offsets = [0, 288], sizes = [8, 32], strides = [1, 1]} : vector<8x512xf32> to vector<8x32xf32>
    %12 = vector.extract_strided_slice %1 {offsets = [0, 320], sizes = [8, 32], strides = [1, 1]} : vector<8x512xf32> to vector<8x32xf32>
    %13 = vector.extract_strided_slice %1 {offsets = [0, 352], sizes = [8, 32], strides = [1, 1]} : vector<8x512xf32> to vector<8x32xf32>
    %14 = vector.extract_strided_slice %1 {offsets = [0, 384], sizes = [8, 32], strides = [1, 1]} : vector<8x512xf32> to vector<8x32xf32>
    %15 = vector.extract_strided_slice %1 {offsets = [0, 416], sizes = [8, 32], strides = [1, 1]} : vector<8x512xf32> to vector<8x32xf32>
    %16 = vector.extract_strided_slice %1 {offsets = [0, 448], sizes = [8, 32], strides = [1, 1]} : vector<8x512xf32> to vector<8x32xf32>
    %17 = vector.extract_strided_slice %1 {offsets = [0, 480], sizes = [8, 32], strides = [1, 1]} : vector<8x512xf32> to vector<8x32xf32>
    %18 = tpu.concatenate %2, %3, %4, %5, %6, %7, %8, %9, %10, %11, %12, %13, %14, %15, %16, %17 in 0 : vector<8x32xf32>, vector<8x32xf32>, vector<8x32xf32>, vector<8x32xf32>, vector<8x32xf32>, vector<8x32xf32>, vector<8x32xf32>, vector<8x32xf32>, vector<8x32xf32>, vector<8x32xf32>, vector<8x32xf32>, vector<8x32xf32>, vector<8x32xf32>, vector<8x32xf32>, vector<8x32xf32>, vector<8x32xf32> -> vector<128x32xf32>
    %cst = arith.constant dense<0.000000e+00> : vector<128xf32>
    %19 = vector.multi_reduction <add>, %18, %cst [1] : vector<128x32xf32> to vector<128xf32>
    %20 = vector.shape_cast %19 : vector<128xf32> to vector<128x1xf32>
    %cst_2 = arith.constant 3.200000e+01 : f32
    %21 = vector.broadcast %cst_2 : f32 to vector<128x1xf32>
    %22 = arith.divf %20, %21 : vector<128x1xf32>
    %23 = vector.broadcast %22 : vector<128x1xf32> to vector<128x32xf32>
    %24 = arith.subf %18, %23 : vector<128x32xf32>
    %25 = arith.mulf %24, %24 : vector<128x32xf32>
    %cst_3 = arith.constant dense<0.000000e+00> : vector<128xf32>
    %26 = vector.multi_reduction <add>, %25, %cst_3 [1] : vector<128x32xf32> to vector<128xf32>
    %27 = vector.shape_cast %26 : vector<128xf32> to vector<128x1xf32>
    %cst_4 = arith.constant 3.200000e+01 : f32
    %28 = vector.broadcast %cst_4 : f32 to vector<128x1xf32>
    %29 = arith.divf %27, %28 : vector<128x1xf32>
    %cst_5 = arith.constant 9.99999974E-6 : f32
    %30 = vector.broadcast %cst_5 : f32 to vector<128x1xf32>
    %31 = arith.addf %29, %30 : vector<128x1xf32>
    %32 = math.rsqrt %31 : vector<128x1xf32>
    %33 = vector.broadcast %32 : vector<128x1xf32> to vector<128x32xf32>
    %34 = arith.mulf %24, %33 : vector<128x32xf32>
    %35 = arith.truncf %34 : vector<128x32xf32> to vector<128x32xbf16>
    %c0_6 = arith.constant 0 : index
    %c0_7 = arith.constant 0 : index
    %36 = vector.load %arg3[%c0_6, %c0_7] : memref<32x96xbf16, #tpu.memory_space<vmem>>, vector<32x96xbf16>
    %cst_8 = arith.constant dense<0.000000e+00> : vector<128x96xf32>
    %37 = tpu.matmul %35, %36, %cst_8 {dimension_numbers = #tpu.dot_dimension_numbers<[1], [0], [0], [1], [0, 0, 1, 1], [], []>} : vector<128x32xbf16>, vector<32x96xbf16>, vector<128x96xf32> -> vector<128x96xf32>
    %c0_9 = arith.constant 0 : index
    %c0_10 = arith.constant 0 : index
    %38 = vector.load %arg4[%c0_9, %c0_10] : memref<1x96xf32, #tpu.memory_space<vmem>>, vector<1x96xf32>
    %39 = vector.broadcast %38 : vector<1x96xf32> to vector<128x96xf32>
    %40 = arith.addf %37, %39 : vector<128x96xf32>
    %41 = vector.extract_strided_slice %40 {offsets = [0, 0], sizes = [128, 32], strides = [1, 1]} : vector<128x96xf32> to vector<128x32xf32>
    %42 = vector.extract_strided_slice %40 {offsets = [0, 32], sizes = [128, 32], strides = [1, 1]} : vector<128x96xf32> to vector<128x32xf32>
    %43 = vector.extract_strided_slice %40 {offsets = [0, 64], sizes = [128, 32], strides = [1, 1]} : vector<128x96xf32> to vector<128x32xf32>
    %44 = vector.extract_strided_slice %41 {offsets = [0, 0], sizes = [64, 8], strides = [1, 1]} : vector<128x32xf32> to vector<64x8xf32>
    %45 = arith.truncf %44 : vector<64x8xf32> to vector<64x8xbf16>
    %46 = vector.extract_strided_slice %42 {offsets = [0, 0], sizes = [64, 8], strides = [1, 1]} : vector<128x32xf32> to vector<64x8xf32>
    %47 = arith.truncf %46 : vector<64x8xf32> to vector<64x8xbf16>
    %48 = vector.extract_strided_slice %43 {offsets = [0, 0], sizes = [64, 8], strides = [1, 1]} : vector<128x32xf32> to vector<64x8xf32>
    %49 = arith.truncf %48 : vector<64x8xf32> to vector<64x8xbf16>
    %cst_11 = arith.constant dense<0.000000e+00> : vector<64x64xf32>
    %50 = tpu.matmul %45, %47, %cst_11 {dimension_numbers = #tpu.dot_dimension_numbers<[1], [1], [0], [0], [0, 0, 1, 0], [], []>} : vector<64x8xbf16>, vector<64x8xbf16>, vector<64x64xf32> -> vector<64x64xf32>
    %cst_12 = arith.constant dense<0xFF800000> : vector<64xf32>
    %51 = vector.multi_reduction <maximumf>, %50, %cst_12 [1] : vector<64x64xf32> to vector<64xf32>
    %52 = vector.shape_cast %51 : vector<64xf32> to vector<64x1xf32>
    %53 = vector.broadcast %52 : vector<64x1xf32> to vector<64x64xf32>
    %54 = arith.subf %50, %53 : vector<64x64xf32>
    %55 = math.exp %54 : vector<64x64xf32>
    %cst_13 = arith.constant dense<0.000000e+00> : vector<64xf32>
    %56 = vector.multi_reduction <add>, %55, %cst_13 [1] : vector<64x64xf32> to vector<64xf32>
    %57 = vector.shape_cast %56 : vector<64xf32> to vector<64x1xf32>
    %58 = tpu.reciprocal %57 {approx = true} : vector<64x1xf32> -> vector<64x1xf32>
    %59 = vector.broadcast %58 : vector<64x1xf32> to vector<64x64xf32>
    %60 = arith.mulf %55, %59 : vector<64x64xf32>
    %61 = arith.truncf %60 : vector<64x64xf32> to vector<64x64xbf16>
    %cst_14 = arith.constant dense<0.000000e+00> : vector<64x8xf32>
    %62 = tpu.matmul %61, %49, %cst_14 {dimension_numbers = #tpu.dot_dimension_numbers<[1], [0], [0], [1], [0, 0, 1, 1], [], []>} : vector<64x64xbf16>, vector<64x8xbf16>, vector<64x8xf32> -> vector<64x8xf32>
    %63 = vector.extract_strided_slice %41 {offsets = [0, 8], sizes = [64, 8], strides = [1, 1]} : vector<128x32xf32> to vector<64x8xf32>
    %64 = arith.truncf %63 : vector<64x8xf32> to vector<64x8xbf16>
    %65 = vector.extract_strided_slice %42 {offsets = [0, 8], sizes = [64, 8], strides = [1, 1]} : vector<128x32xf32> to vector<64x8xf32>
    %66 = arith.truncf %65 : vector<64x8xf32> to vector<64x8xbf16>
    %67 = vector.extract_strided_slice %43 {offsets = [0, 8], sizes = [64, 8], strides = [1, 1]} : vector<128x32xf32> to vector<64x8xf32>
    %68 = arith.truncf %67 : vector<64x8xf32> to vector<64x8xbf16>
    %cst_15 = arith.constant dense<0.000000e+00> : vector<64x64xf32>
    %69 = tpu.matmul %64, %66, %cst_15 {dimension_numbers = #tpu.dot_dimension_numbers<[1], [1], [0], [0], [0, 0, 1, 0], [], []>} : vector<64x8xbf16>, vector<64x8xbf16>, vector<64x64xf32> -> vector<64x64xf32>
    %cst_16 = arith.constant dense<0xFF800000> : vector<64xf32>
    %70 = vector.multi_reduction <maximumf>, %69, %cst_16 [1] : vector<64x64xf32> to vector<64xf32>
    %71 = vector.shape_cast %70 : vector<64xf32> to vector<64x1xf32>
    %72 = vector.broadcast %71 : vector<64x1xf32> to vector<64x64xf32>
    %73 = arith.subf %69, %72 : vector<64x64xf32>
    %74 = math.exp %73 : vector<64x64xf32>
    %cst_17 = arith.constant dense<0.000000e+00> : vector<64xf32>
    %75 = vector.multi_reduction <add>, %74, %cst_17 [1] : vector<64x64xf32> to vector<64xf32>
    %76 = vector.shape_cast %75 : vector<64xf32> to vector<64x1xf32>
    %77 = tpu.reciprocal %76 {approx = true} : vector<64x1xf32> -> vector<64x1xf32>
    %78 = vector.broadcast %77 : vector<64x1xf32> to vector<64x64xf32>
    %79 = arith.mulf %74, %78 : vector<64x64xf32>
    %80 = arith.truncf %79 : vector<64x64xf32> to vector<64x64xbf16>
    %cst_18 = arith.constant dense<0.000000e+00> : vector<64x8xf32>
    %81 = tpu.matmul %80, %68, %cst_18 {dimension_numbers = #tpu.dot_dimension_numbers<[1], [0], [0], [1], [0, 0, 1, 1], [], []>} : vector<64x64xbf16>, vector<64x8xbf16>, vector<64x8xf32> -> vector<64x8xf32>
    %82 = vector.extract_strided_slice %41 {offsets = [0, 16], sizes = [64, 8], strides = [1, 1]} : vector<128x32xf32> to vector<64x8xf32>
    %83 = arith.truncf %82 : vector<64x8xf32> to vector<64x8xbf16>
    %84 = vector.extract_strided_slice %42 {offsets = [0, 16], sizes = [64, 8], strides = [1, 1]} : vector<128x32xf32> to vector<64x8xf32>
    %85 = arith.truncf %84 : vector<64x8xf32> to vector<64x8xbf16>
    %86 = vector.extract_strided_slice %43 {offsets = [0, 16], sizes = [64, 8], strides = [1, 1]} : vector<128x32xf32> to vector<64x8xf32>
    %87 = arith.truncf %86 : vector<64x8xf32> to vector<64x8xbf16>
    %cst_19 = arith.constant dense<0.000000e+00> : vector<64x64xf32>
    %88 = tpu.matmul %83, %85, %cst_19 {dimension_numbers = #tpu.dot_dimension_numbers<[1], [1], [0], [0], [0, 0, 1, 0], [], []>} : vector<64x8xbf16>, vector<64x8xbf16>, vector<64x64xf32> -> vector<64x64xf32>
    %cst_20 = arith.constant dense<0xFF800000> : vector<64xf32>
    %89 = vector.multi_reduction <maximumf>, %88, %cst_20 [1] : vector<64x64xf32> to vector<64xf32>
    %90 = vector.shape_cast %89 : vector<64xf32> to vector<64x1xf32>
    %91 = vector.broadcast %90 : vector<64x1xf32> to vector<64x64xf32>
    %92 = arith.subf %88, %91 : vector<64x64xf32>
    %93 = math.exp %92 : vector<64x64xf32>
    %cst_21 = arith.constant dense<0.000000e+00> : vector<64xf32>
    %94 = vector.multi_reduction <add>, %93, %cst_21 [1] : vector<64x64xf32> to vector<64xf32>
    %95 = vector.shape_cast %94 : vector<64xf32> to vector<64x1xf32>
    %96 = tpu.reciprocal %95 {approx = true} : vector<64x1xf32> -> vector<64x1xf32>
    %97 = vector.broadcast %96 : vector<64x1xf32> to vector<64x64xf32>
    %98 = arith.mulf %93, %97 : vector<64x64xf32>
    %99 = arith.truncf %98 : vector<64x64xf32> to vector<64x64xbf16>
    %cst_22 = arith.constant dense<0.000000e+00> : vector<64x8xf32>
    %100 = tpu.matmul %99, %87, %cst_22 {dimension_numbers = #tpu.dot_dimension_numbers<[1], [0], [0], [1], [0, 0, 1, 1], [], []>} : vector<64x64xbf16>, vector<64x8xbf16>, vector<64x8xf32> -> vector<64x8xf32>
    %101 = vector.extract_strided_slice %41 {offsets = [0, 24], sizes = [64, 8], strides = [1, 1]} : vector<128x32xf32> to vector<64x8xf32>
    %102 = arith.truncf %101 : vector<64x8xf32> to vector<64x8xbf16>
    %103 = vector.extract_strided_slice %42 {offsets = [0, 24], sizes = [64, 8], strides = [1, 1]} : vector<128x32xf32> to vector<64x8xf32>
    %104 = arith.truncf %103 : vector<64x8xf32> to vector<64x8xbf16>
    %105 = vector.extract_strided_slice %43 {offsets = [0, 24], sizes = [64, 8], strides = [1, 1]} : vector<128x32xf32> to vector<64x8xf32>
    %106 = arith.truncf %105 : vector<64x8xf32> to vector<64x8xbf16>
    %cst_23 = arith.constant dense<0.000000e+00> : vector<64x64xf32>
    %107 = tpu.matmul %102, %104, %cst_23 {dimension_numbers = #tpu.dot_dimension_numbers<[1], [1], [0], [0], [0, 0, 1, 0], [], []>} : vector<64x8xbf16>, vector<64x8xbf16>, vector<64x64xf32> -> vector<64x64xf32>
    %cst_24 = arith.constant dense<0xFF800000> : vector<64xf32>
    %108 = vector.multi_reduction <maximumf>, %107, %cst_24 [1] : vector<64x64xf32> to vector<64xf32>
    %109 = vector.shape_cast %108 : vector<64xf32> to vector<64x1xf32>
    %110 = vector.broadcast %109 : vector<64x1xf32> to vector<64x64xf32>
    %111 = arith.subf %107, %110 : vector<64x64xf32>
    %112 = math.exp %111 : vector<64x64xf32>
    %cst_25 = arith.constant dense<0.000000e+00> : vector<64xf32>
    %113 = vector.multi_reduction <add>, %112, %cst_25 [1] : vector<64x64xf32> to vector<64xf32>
    %114 = vector.shape_cast %113 : vector<64xf32> to vector<64x1xf32>
    %115 = tpu.reciprocal %114 {approx = true} : vector<64x1xf32> -> vector<64x1xf32>
    %116 = vector.broadcast %115 : vector<64x1xf32> to vector<64x64xf32>
    %117 = arith.mulf %112, %116 : vector<64x64xf32>
    %118 = arith.truncf %117 : vector<64x64xf32> to vector<64x64xbf16>
    %cst_26 = arith.constant dense<0.000000e+00> : vector<64x8xf32>
    %119 = tpu.matmul %118, %106, %cst_26 {dimension_numbers = #tpu.dot_dimension_numbers<[1], [0], [0], [1], [0, 0, 1, 1], [], []>} : vector<64x64xbf16>, vector<64x8xbf16>, vector<64x8xf32> -> vector<64x8xf32>
    %120 = tpu.concatenate %62, %81, %100, %119 in 1 : vector<64x8xf32>, vector<64x8xf32>, vector<64x8xf32>, vector<64x8xf32> -> vector<64x32xf32>
    %121 = vector.extract_strided_slice %41 {offsets = [64, 0], sizes = [64, 8], strides = [1, 1]} : vector<128x32xf32> to vector<64x8xf32>
    %122 = arith.truncf %121 : vector<64x8xf32> to vector<64x8xbf16>
    %123 = vector.extract_strided_slice %42 {offsets = [64, 0], sizes = [64, 8], strides = [1, 1]} : vector<128x32xf32> to vector<64x8xf32>
    %124 = arith.truncf %123 : vector<64x8xf32> to vector<64x8xbf16>
    %125 = vector.extract_strided_slice %43 {offsets = [64, 0], sizes = [64, 8], strides = [1, 1]} : vector<128x32xf32> to vector<64x8xf32>
    %126 = arith.truncf %125 : vector<64x8xf32> to vector<64x8xbf16>
    %cst_27 = arith.constant dense<0.000000e+00> : vector<64x64xf32>
    %127 = tpu.matmul %122, %124, %cst_27 {dimension_numbers = #tpu.dot_dimension_numbers<[1], [1], [0], [0], [0, 0, 1, 0], [], []>} : vector<64x8xbf16>, vector<64x8xbf16>, vector<64x64xf32> -> vector<64x64xf32>
    %cst_28 = arith.constant dense<0xFF800000> : vector<64xf32>
    %128 = vector.multi_reduction <maximumf>, %127, %cst_28 [1] : vector<64x64xf32> to vector<64xf32>
    %129 = vector.shape_cast %128 : vector<64xf32> to vector<64x1xf32>
    %130 = vector.broadcast %129 : vector<64x1xf32> to vector<64x64xf32>
    %131 = arith.subf %127, %130 : vector<64x64xf32>
    %132 = math.exp %131 : vector<64x64xf32>
    %cst_29 = arith.constant dense<0.000000e+00> : vector<64xf32>
    %133 = vector.multi_reduction <add>, %132, %cst_29 [1] : vector<64x64xf32> to vector<64xf32>
    %134 = vector.shape_cast %133 : vector<64xf32> to vector<64x1xf32>
    %135 = tpu.reciprocal %134 {approx = true} : vector<64x1xf32> -> vector<64x1xf32>
    %136 = vector.broadcast %135 : vector<64x1xf32> to vector<64x64xf32>
    %137 = arith.mulf %132, %136 : vector<64x64xf32>
    %138 = arith.truncf %137 : vector<64x64xf32> to vector<64x64xbf16>
    %cst_30 = arith.constant dense<0.000000e+00> : vector<64x8xf32>
    %139 = tpu.matmul %138, %126, %cst_30 {dimension_numbers = #tpu.dot_dimension_numbers<[1], [0], [0], [1], [0, 0, 1, 1], [], []>} : vector<64x64xbf16>, vector<64x8xbf16>, vector<64x8xf32> -> vector<64x8xf32>
    %140 = vector.extract_strided_slice %41 {offsets = [64, 8], sizes = [64, 8], strides = [1, 1]} : vector<128x32xf32> to vector<64x8xf32>
    %141 = arith.truncf %140 : vector<64x8xf32> to vector<64x8xbf16>
    %142 = vector.extract_strided_slice %42 {offsets = [64, 8], sizes = [64, 8], strides = [1, 1]} : vector<128x32xf32> to vector<64x8xf32>
    %143 = arith.truncf %142 : vector<64x8xf32> to vector<64x8xbf16>
    %144 = vector.extract_strided_slice %43 {offsets = [64, 8], sizes = [64, 8], strides = [1, 1]} : vector<128x32xf32> to vector<64x8xf32>
    %145 = arith.truncf %144 : vector<64x8xf32> to vector<64x8xbf16>
    %cst_31 = arith.constant dense<0.000000e+00> : vector<64x64xf32>
    %146 = tpu.matmul %141, %143, %cst_31 {dimension_numbers = #tpu.dot_dimension_numbers<[1], [1], [0], [0], [0, 0, 1, 0], [], []>} : vector<64x8xbf16>, vector<64x8xbf16>, vector<64x64xf32> -> vector<64x64xf32>
    %cst_32 = arith.constant dense<0xFF800000> : vector<64xf32>
    %147 = vector.multi_reduction <maximumf>, %146, %cst_32 [1] : vector<64x64xf32> to vector<64xf32>
    %148 = vector.shape_cast %147 : vector<64xf32> to vector<64x1xf32>
    %149 = vector.broadcast %148 : vector<64x1xf32> to vector<64x64xf32>
    %150 = arith.subf %146, %149 : vector<64x64xf32>
    %151 = math.exp %150 : vector<64x64xf32>
    %cst_33 = arith.constant dense<0.000000e+00> : vector<64xf32>
    %152 = vector.multi_reduction <add>, %151, %cst_33 [1] : vector<64x64xf32> to vector<64xf32>
    %153 = vector.shape_cast %152 : vector<64xf32> to vector<64x1xf32>
    %154 = tpu.reciprocal %153 {approx = true} : vector<64x1xf32> -> vector<64x1xf32>
    %155 = vector.broadcast %154 : vector<64x1xf32> to vector<64x64xf32>
    %156 = arith.mulf %151, %155 : vector<64x64xf32>
    %157 = arith.truncf %156 : vector<64x64xf32> to vector<64x64xbf16>
    %cst_34 = arith.constant dense<0.000000e+00> : vector<64x8xf32>
    %158 = tpu.matmul %157, %145, %cst_34 {dimension_numbers = #tpu.dot_dimension_numbers<[1], [0], [0], [1], [0, 0, 1, 1], [], []>} : vector<64x64xbf16>, vector<64x8xbf16>, vector<64x8xf32> -> vector<64x8xf32>
    %159 = vector.extract_strided_slice %41 {offsets = [64, 16], sizes = [64, 8], strides = [1, 1]} : vector<128x32xf32> to vector<64x8xf32>
    %160 = arith.truncf %159 : vector<64x8xf32> to vector<64x8xbf16>
    %161 = vector.extract_strided_slice %42 {offsets = [64, 16], sizes = [64, 8], strides = [1, 1]} : vector<128x32xf32> to vector<64x8xf32>
    %162 = arith.truncf %161 : vector<64x8xf32> to vector<64x8xbf16>
    %163 = vector.extract_strided_slice %43 {offsets = [64, 16], sizes = [64, 8], strides = [1, 1]} : vector<128x32xf32> to vector<64x8xf32>
    %164 = arith.truncf %163 : vector<64x8xf32> to vector<64x8xbf16>
    %cst_35 = arith.constant dense<0.000000e+00> : vector<64x64xf32>
    %165 = tpu.matmul %160, %162, %cst_35 {dimension_numbers = #tpu.dot_dimension_numbers<[1], [1], [0], [0], [0, 0, 1, 0], [], []>} : vector<64x8xbf16>, vector<64x8xbf16>, vector<64x64xf32> -> vector<64x64xf32>
    %cst_36 = arith.constant dense<0xFF800000> : vector<64xf32>
    %166 = vector.multi_reduction <maximumf>, %165, %cst_36 [1] : vector<64x64xf32> to vector<64xf32>
    %167 = vector.shape_cast %166 : vector<64xf32> to vector<64x1xf32>
    %168 = vector.broadcast %167 : vector<64x1xf32> to vector<64x64xf32>
    %169 = arith.subf %165, %168 : vector<64x64xf32>
    %170 = math.exp %169 : vector<64x64xf32>
    %cst_37 = arith.constant dense<0.000000e+00> : vector<64xf32>
    %171 = vector.multi_reduction <add>, %170, %cst_37 [1] : vector<64x64xf32> to vector<64xf32>
    %172 = vector.shape_cast %171 : vector<64xf32> to vector<64x1xf32>
    %173 = tpu.reciprocal %172 {approx = true} : vector<64x1xf32> -> vector<64x1xf32>
    %174 = vector.broadcast %173 : vector<64x1xf32> to vector<64x64xf32>
    %175 = arith.mulf %170, %174 : vector<64x64xf32>
    %176 = arith.truncf %175 : vector<64x64xf32> to vector<64x64xbf16>
    %cst_38 = arith.constant dense<0.000000e+00> : vector<64x8xf32>
    %177 = tpu.matmul %176, %164, %cst_38 {dimension_numbers = #tpu.dot_dimension_numbers<[1], [0], [0], [1], [0, 0, 1, 1], [], []>} : vector<64x64xbf16>, vector<64x8xbf16>, vector<64x8xf32> -> vector<64x8xf32>
    %178 = vector.extract_strided_slice %41 {offsets = [64, 24], sizes = [64, 8], strides = [1, 1]} : vector<128x32xf32> to vector<64x8xf32>
    %179 = arith.truncf %178 : vector<64x8xf32> to vector<64x8xbf16>
    %180 = vector.extract_strided_slice %42 {offsets = [64, 24], sizes = [64, 8], strides = [1, 1]} : vector<128x32xf32> to vector<64x8xf32>
    %181 = arith.truncf %180 : vector<64x8xf32> to vector<64x8xbf16>
    %182 = vector.extract_strided_slice %43 {offsets = [64, 24], sizes = [64, 8], strides = [1, 1]} : vector<128x32xf32> to vector<64x8xf32>
    %183 = arith.truncf %182 : vector<64x8xf32> to vector<64x8xbf16>
    %cst_39 = arith.constant dense<0.000000e+00> : vector<64x64xf32>
    %184 = tpu.matmul %179, %181, %cst_39 {dimension_numbers = #tpu.dot_dimension_numbers<[1], [1], [0], [0], [0, 0, 1, 0], [], []>} : vector<64x8xbf16>, vector<64x8xbf16>, vector<64x64xf32> -> vector<64x64xf32>
    %cst_40 = arith.constant dense<0xFF800000> : vector<64xf32>
    %185 = vector.multi_reduction <maximumf>, %184, %cst_40 [1] : vector<64x64xf32> to vector<64xf32>
    %186 = vector.shape_cast %185 : vector<64xf32> to vector<64x1xf32>
    %187 = vector.broadcast %186 : vector<64x1xf32> to vector<64x64xf32>
    %188 = arith.subf %184, %187 : vector<64x64xf32>
    %189 = math.exp %188 : vector<64x64xf32>
    %cst_41 = arith.constant dense<0.000000e+00> : vector<64xf32>
    %190 = vector.multi_reduction <add>, %189, %cst_41 [1] : vector<64x64xf32> to vector<64xf32>
    %191 = vector.shape_cast %190 : vector<64xf32> to vector<64x1xf32>
    %192 = tpu.reciprocal %191 {approx = true} : vector<64x1xf32> -> vector<64x1xf32>
    %193 = vector.broadcast %192 : vector<64x1xf32> to vector<64x64xf32>
    %194 = arith.mulf %189, %193 : vector<64x64xf32>
    %195 = arith.truncf %194 : vector<64x64xf32> to vector<64x64xbf16>
    %cst_42 = arith.constant dense<0.000000e+00> : vector<64x8xf32>
    %196 = tpu.matmul %195, %183, %cst_42 {dimension_numbers = #tpu.dot_dimension_numbers<[1], [0], [0], [1], [0, 0, 1, 1], [], []>} : vector<64x64xbf16>, vector<64x8xbf16>, vector<64x8xf32> -> vector<64x8xf32>
    %197 = tpu.concatenate %139, %158, %177, %196 in 1 : vector<64x8xf32>, vector<64x8xf32>, vector<64x8xf32>, vector<64x8xf32> -> vector<64x32xf32>
    %198 = tpu.concatenate %120, %197 in 0 : vector<64x32xf32>, vector<64x32xf32> -> vector<128x32xf32>
    %199 = arith.truncf %198 : vector<128x32xf32> to vector<128x32xbf16>
    %c0_43 = arith.constant 0 : index
    %c0_44 = arith.constant 0 : index
    %200 = vector.load %arg5[%c0_43, %c0_44] : memref<32x32xbf16, #tpu.memory_space<vmem>>, vector<32x32xbf16>
    %cst_45 = arith.constant dense<0.000000e+00> : vector<128x32xf32>
    %201 = tpu.matmul %199, %200, %cst_45 {dimension_numbers = #tpu.dot_dimension_numbers<[1], [0], [0], [1], [0, 0, 1, 1], [], []>} : vector<128x32xbf16>, vector<32x32xbf16>, vector<128x32xf32> -> vector<128x32xf32>
    %c0_46 = arith.constant 0 : index
    %c0_47 = arith.constant 0 : index
    %202 = vector.load %arg6[%c0_46, %c0_47] : memref<1x32xf32, #tpu.memory_space<vmem>>, vector<1x32xf32>
    %203 = vector.broadcast %202 : vector<1x32xf32> to vector<128x32xf32>
    %204 = arith.addf %201, %203 : vector<128x32xf32>
    %205 = vector.extract_strided_slice %204 {offsets = [0, 0], sizes = [8, 32], strides = [1, 1]} : vector<128x32xf32> to vector<8x32xf32>
    %206 = vector.extract_strided_slice %204 {offsets = [8, 0], sizes = [8, 32], strides = [1, 1]} : vector<128x32xf32> to vector<8x32xf32>
    %207 = vector.extract_strided_slice %204 {offsets = [16, 0], sizes = [8, 32], strides = [1, 1]} : vector<128x32xf32> to vector<8x32xf32>
    %208 = vector.extract_strided_slice %204 {offsets = [24, 0], sizes = [8, 32], strides = [1, 1]} : vector<128x32xf32> to vector<8x32xf32>
    %209 = vector.extract_strided_slice %204 {offsets = [32, 0], sizes = [8, 32], strides = [1, 1]} : vector<128x32xf32> to vector<8x32xf32>
    %210 = vector.extract_strided_slice %204 {offsets = [40, 0], sizes = [8, 32], strides = [1, 1]} : vector<128x32xf32> to vector<8x32xf32>
    %211 = vector.extract_strided_slice %204 {offsets = [48, 0], sizes = [8, 32], strides = [1, 1]} : vector<128x32xf32> to vector<8x32xf32>
    %212 = vector.extract_strided_slice %204 {offsets = [56, 0], sizes = [8, 32], strides = [1, 1]} : vector<128x32xf32> to vector<8x32xf32>
    %213 = vector.extract_strided_slice %204 {offsets = [64, 0], sizes = [8, 32], strides = [1, 1]} : vector<128x32xf32> to vector<8x32xf32>
    %214 = vector.extract_strided_slice %204 {offsets = [72, 0], sizes = [8, 32], strides = [1, 1]} : vector<128x32xf32> to vector<8x32xf32>
    %215 = vector.extract_strided_slice %204 {offsets = [80, 0], sizes = [8, 32], strides = [1, 1]} : vector<128x32xf32> to vector<8x32xf32>
    %216 = vector.extract_strided_slice %204 {offsets = [88, 0], sizes = [8, 32], strides = [1, 1]} : vector<128x32xf32> to vector<8x32xf32>
    %217 = vector.extract_strided_slice %204 {offsets = [96, 0], sizes = [8, 32], strides = [1, 1]} : vector<128x32xf32> to vector<8x32xf32>
    %218 = vector.extract_strided_slice %204 {offsets = [104, 0], sizes = [8, 32], strides = [1, 1]} : vector<128x32xf32> to vector<8x32xf32>
    %219 = vector.extract_strided_slice %204 {offsets = [112, 0], sizes = [8, 32], strides = [1, 1]} : vector<128x32xf32> to vector<8x32xf32>
    %220 = vector.extract_strided_slice %204 {offsets = [120, 0], sizes = [8, 32], strides = [1, 1]} : vector<128x32xf32> to vector<8x32xf32>
    %221 = tpu.concatenate %205, %206, %207, %208, %209, %210, %211, %212, %213, %214, %215, %216, %217, %218, %219, %220 in 1 : vector<8x32xf32>, vector<8x32xf32>, vector<8x32xf32>, vector<8x32xf32>, vector<8x32xf32>, vector<8x32xf32>, vector<8x32xf32>, vector<8x32xf32>, vector<8x32xf32>, vector<8x32xf32>, vector<8x32xf32>, vector<8x32xf32>, vector<8x32xf32>, vector<8x32xf32>, vector<8x32xf32>, vector<8x32xf32> -> vector<8x512xf32>
    %222 = vector.shape_cast %221 : vector<8x512xf32> to vector<1x8x512xf32>
    %c0_48 = arith.constant 0 : index
    %c0_49 = arith.constant 0 : index
    %c0_50 = arith.constant 0 : index
    %223 = vector.load %arg7[%c0_48, %c0_49, %c0_50] : memref<1x8x512xf32, #tpu.memory_space<vmem>>, vector<1x8x512xf32>
    tpu.vector_store %arg7[%c0_48, %c0_49, %c0_50], %222 {strides = array<i32>} : memref<1x8x512xf32, #tpu.memory_space<vmem>>, vector<1x8x512xf32>,
    return
  }
  func.func @transform_0(%arg0: i32, %arg1: i32) -> (i32, i32, i32) {
    %c0_i32 = arith.constant 0 : i32
    %c0_i32_0 = arith.constant 0 : i32
    return %arg0, %arg1, %c0_i32 : i32, i32, i32
  }
  func.func @transform_1(%arg0: i32, %arg1: i32) -> (i32, i32) {
    %c0_i32 = arith.constant 0 : i32
    %c0_i32_0 = arith.constant 0 : i32
    %c0_i32_1 = arith.constant 0 : i32
    return %c0_i32, %c0_i32_0 : i32, i32
  }
  func.func @transform_2(%arg0: i32, %arg1: i32) -> (i32, i32) {
    %c0_i32 = arith.constant 0 : i32
    %c0_i32_0 = arith.constant 0 : i32
    %c0_i32_1 = arith.constant 0 : i32
    return %c0_i32, %c0_i32_0 : i32, i32
  }
  func.func @transform_3(%arg0: i32, %arg1: i32) -> (i32, i32) {
    %c0_i32 = arith.constant 0 : i32
    %c0_i32_0 = arith.constant 0 : i32
    %c0_i32_1 = arith.constant 0 : i32
    return %c0_i32, %c0_i32_0 : i32, i32
  }
  func.func @transform_4(%arg0: i32, %arg1: i32) -> (i32, i32) {
    %c0_i32 = arith.constant 0 : i32
    %c0_i32_0 = arith.constant 0 : i32
    %c0_i32_1 = arith.constant 0 : i32
    return %c0_i32, %c0_i32_0 : i32, i32
  }
  func.func @transform_5(%arg0: i32, %arg1: i32) -> (i32, i32, i32) {
    %c0_i32 = arith.constant 0 : i32
    %c0_i32_0 = arith.constant 0 : i32
    return %arg0, %arg1, %c0_i32 : i32, i32, i32
  }
}

</mosaic_0001>

<llo_original>
// kernel: tpu_custom_call.1
$region0: #{tpu_custom_call.1}
  #allocation0 [shape = 'u32[]', space=smem, size = 0x4, offset = 0x4, fixed_abs, tag = 'smem constant byte address 0x4 - core index']
  #allocation1 [shape = 'u32[72,128]{1,0:T(1,128)}', space=vmem, size = 0x9000, scoped, tag = 'internal scratch']
  %s0 = inlined_call_operand.hbm [shape: f32[2,16,512], index: 0, kind: input, shape index: {}]
  %s1 = inlined_call_operand.hbm [shape: bf16[32,96], index: 1, kind: input, shape index: {}]
  %s2 = inlined_call_operand.vmem [shape: f32[1,96], index: 2, kind: input, shape index: {}]
  %s3 = inlined_call_operand.hbm [shape: bf16[32,32], index: 3, kind: input, shape index: {}]
  %s4 = inlined_call_operand.vmem [shape: f32[1,32], index: 4, kind: input, shape index: {}]
  %s5 = inlined_call_operand.hbm [shape: f32[2,16,512], index: 5, kind: output, shape index: {}]
  %s6 = sld [smem:[#allocation0]]
  $region65: #{tpu_custom_call.1} parent=0
    _
  %s8 = ssub.s32 1, %s6
  %s9 = scalar_select 0, %s8, %s6
  $region1: #{tpu_custom_call.1} parent=0
    #allocation2 [shape = 'u8[32768]{0}', space=vmem, size = 0x8000, scoped, tag = 'input window, operand 0']
    #allocation3 [shape = 's32[2]{0}', space=sflag, size = 0x8, scoped, tag = 'scoped memory for tpu_custom_call.1']
    #allocation4 [shape = 's32[2]{0}', space=sflag, size = 0x8, scoped, tag = 'scoped memory for tpu_custom_call.1']
    #allocation5 [shape = 'u8[8192]{0}', space=vmem, size = 0x2000, scoped, tag = 'input window, operand 1, single buffered']
    #allocation6 [shape = 's32[1]{0}', space=sflag, size = 0x4, scoped, tag = 'scoped memory for tpu_custom_call.1']
    #allocation7 [shape = 'u8[8192]{0}', space=vmem, size = 0x2000, scoped, tag = 'input window, operand 3, single buffered']
    #allocation8 [shape = 'u8[32768]{0}', space=vmem, size = 0x8000, scoped, tag = 'output window, operand 0']
    %10 = vsyncpa [#allocation3], 0
    %s11 = scalar_lea.sflag [#allocation3], 1
    %12 = vsyncpa %s11, 0
    %13 = vsyncpa [#allocation6], 0
    %14 = vsyncpa [#allocation4], 0
    %s15 = scalar_lea.sflag [#allocation4], 1
    %16 = vsyncpa %s15, 0
    loop: start=0, step=1, limit=6
    $region2: #{tpu_custom_call.1} parent=1 // loop_pre_header
      _
    $region3: #{tpu_custom_call.1} parent=1 // loop_header
      %s18 = sphi 0, %s22
      %p19 = scmp.ge.s32.totalorder %s18, 6
      %s25 = sphi 0, %s37
      %s26 = sphi 0, %s33
      %s27 = sphi 0, %s25
      %s28 = sphi 0, %s26
      %s29 = sphi 0, %s27
      %s30 = sphi 0, %s28
      %s42 = sphi 0, %s44
      %s45 = sphi 0, %s42
      %s46 = sphi 0, %s45
      %s62 = sphi 0, %s46
      %s66 = sphi 0, %s66
      %s68 = sphi 0, %s66
      %s69 = sphi 0, %s68
      %s83 = sphi 0, %s69
      %s87 = sphi 0, %s87
      %s89 = sphi 0, %s87
      %s90 = sphi 0, %s89
      %s104 = sphi 0, %s90
      %s108 = sphi 0, %s108
      %s110 = sphi 0, %s108
      %s111 = sphi 0, %s110
      %s125 = sphi 0, %s111
      %s129 = sphi 0, %s129
      %s131 = sphi 0, %s129
      %s132 = sphi 0, %s131
      %s146 = sphi 0, %s132
      %s154 = sphi 0, %s156
      %s157 = sphi 0, %s154
      %s158 = sphi 0, %s157
      %s174 = sphi 0, %s158
    $region4: #{tpu_custom_call.1} parent=1 // loop_header_branch
      %21 = sbr.rel (%p19) target = $region8
    $region5: #{tpu_custom_call.1} parent=1 // loop_body
      %s23 = ssub.s32 %s18, 1
      %s24 = ssub.s32 %s18, 2
      %s31 = sadd.s32 1, %s26
      %p32 = scmp.ge.s32.totalorder %s31, 2
      %s33 = scalar_select %p32, 0, %s31
      %s34 = sadd.s32 1, %s25
      %s35 = scalar_select %p32, %s34, %s25
      %p36 = scmp.ge.s32.totalorder %s35, 2
      %s37 = scalar_select %p36, 0, %s35
      %s38 = ssub.s32 %s25, %s37
      %s39 = ssub.s32 %s26, %s33
      %s40 = sor.u32 %s38, %s39
      %p41 = scmp.eq.s32.totalorder %s40, 0
      %s43 = sadd.s32 %s42, 1
      %s44 = scalar_select %p41, %s42, %s43
      %p47 = pneg %p41
      %p48 = scmp.eq.s32.totalorder %s18, 3
      %p49 = por %p47, %p48
      %p50 = scmp.ne.s32.totalorder %s42, %s45
      %p51 = scmp.eq.s32.totalorder %s18, 0
      %p52 = por %p50, %p51
      %p53 = scmp.ne.s32.totalorder %s42, %s45
      %p54 = scmp.eq.s32.totalorder %s23, 3
      %p55 = por %p53, %p54
      %p56 = scmp.ne.s32.totalorder %s45, %s46
      %p57 = scmp.eq.s32.totalorder %s23, 0
      %p58 = por %p56, %p57
      %p59 = scmp.ne.s32.totalorder %s45, %s46
      %p60 = scmp.eq.s32.totalorder %s24, 3
      %p61 = por %p59, %p60
      %p63 = scmp.ne.s32.totalorder %s46, %s62
      %p64 = scmp.eq.s32.totalorder %s24, 0
      %p65 = por %p63, %p64
      %s67 = sadd.s32 %s66, 1
      %p70 = scmp.eq.s32.totalorder %s18, 3
      %p71 = scmp.ne.s32.totalorder %s66, %s68
      %p72 = scmp.eq.s32.totalorder %s18, 0
      %p73 = por %p71, %p72
      %p74 = scmp.ne.s32.totalorder %s66, %s68
      %p75 = scmp.eq.s32.totalorder %s23, 3
      %p76 = por %p74, %p75
      %p77 = scmp.ne.s32.totalorder %s68, %s69
      %p78 = scmp.eq.s32.totalorder %s23, 0
      %p79 = por %p77, %p78
      %p80 = scmp.ne.s32.totalorder %s68, %s69
      %p81 = scmp.eq.s32.totalorder %s24, 3
      %p82 = por %p80, %p81
      %p84 = scmp.ne.s32.totalorder %s69, %s83
      %p85 = scmp.eq.s32.totalorder %s24, 0
      %p86 = por %p84, %p85
      %s88 = sadd.s32 %s87, 1
      %p91 = scmp.eq.s32.totalorder %s18, 3
      %p92 = scmp.ne.s32.totalorder %s87, %s89
      %p93 = scmp.eq.s32.totalorder %s18, 0
      %p94 = por %p92, %p93
      %p95 = scmp.ne.s32.totalorder %s87, %s89
      %p96 = scmp.eq.s32.totalorder %s23, 3
      %p97 = por %p95, %p96
      %p98 = scmp.ne.s32.totalorder %s89, %s90
      %p99 = scmp.eq.s32.totalorder %s23, 0
      %p100 = por %p98, %p99
      %p101 = scmp.ne.s32.totalorder %s89, %s90
      %p102 = scmp.eq.s32.totalorder %s24, 3
      %p103 = por %p101, %p102
      %p105 = scmp.ne.s32.totalorder %s90, %s104
      %p106 = scmp.eq.s32.totalorder %s24, 0
      %p107 = por %p105, %p106
      %s109 = sadd.s32 %s108, 1
      %p112 = scmp.eq.s32.totalorder %s18, 3
      %p113 = scmp.ne.s32.totalorder %s108, %s110
      %p114 = scmp.eq.s32.totalorder %s18, 0
      %p115 = por %p113, %p114
      %p116 = scmp.ne.s32.totalorder %s108, %s110
      %p117 = scmp.eq.s32.totalorder %s23, 3
      %p118 = por %p116, %p117
      %p119 = scmp.ne.s32.totalorder %s110, %s111
      %p120 = scmp.eq.s32.totalorder %s23, 0
      %p121 = por %p119, %p120
      %p122 = scmp.ne.s32.totalorder %s110, %s111
      %p123 = scmp.eq.s32.totalorder %s24, 3
      %p124 = por %p122, %p123
      %p126 = scmp.ne.s32.totalorder %s111, %s125
      %p127 = scmp.eq.s32.totalorder %s24, 0
      %p128 = por %p126, %p127
      %s130 = sadd.s32 %s129, 1
      %p133 = scmp.eq.s32.totalorder %s18, 3
      %p134 = scmp.ne.s32.totalorder %s129, %s131
      %p135 = scmp.eq.s32.totalorder %s18, 0
      %p136 = por %p134, %p135
      %p137 = scmp.ne.s32.totalorder %s129, %s131
      %p138 = scmp.eq.s32.totalorder %s23, 3
      %p139 = por %p137, %p138
      %p140 = scmp.ne.s32.totalorder %s131, %s132
      %p141 = scmp.eq.s32.totalorder %s23, 0
      %p142 = por %p140, %p141
      %p143 = scmp.ne.s32.totalorder %s131, %s132
      %p144 = scmp.eq.s32.totalorder %s24, 3
      %p145 = por %p143, %p144
      %p147 = scmp.ne.s32.totalorder %s132, %s146
      %p148 = scmp.eq.s32.totalorder %s24, 0
      %p149 = por %p147, %p148
      %s150 = ssub.s32 %s25, %s37
      %s151 = ssub.s32 %s26, %s33
      %s152 = sor.u32 %s150, %s151
      %p153 = scmp.eq.s32.totalorder %s152, 0
      %s155 = sadd.s32 %s154, 1
      %s156 = scalar_select %p153, %s154, %s155
      %p159 = pneg %p153
      %p160 = scmp.eq.s32.totalorder %s18, 3
      %p161 = por %p159, %p160
      %p162 = scmp.ne.s32.totalorder %s154, %s157
      %p163 = scmp.eq.s32.totalorder %s18, 0
      %p164 = por %p162, %p163
      %p165 = scmp.ne.s32.totalorder %s154, %s157
      %p166 = scmp.eq.s32.totalorder %s23, 3
      %p167 = por %p165, %p166
      %p168 = scmp.ne.s32.totalorder %s157, %s158
      %p169 = scmp.eq.s32.totalorder %s23, 0
      %p170 = por %p168, %p169
      %p171 = scmp.ne.s32.totalorder %s157, %s158
      %p172 = scmp.eq.s32.totalorder %s24, 3
      %p173 = por %p171, %p172
      %p175 = scmp.ne.s32.totalorder %s158, %s174
      %p176 = scmp.eq.s32.totalorder %s24, 0
      %p177 = por %p175, %p176
      %p178 = scmp.le.s32.totalorder 1, %s18
      %p179 = scmp.lt.s32.totalorder %s18, 5
      %p180 = pnand %p178, %p179
      %p181 = pneg %p180
      // Predicated region
      $region9: #{tpu_custom_call.1} parent=5 // pred_check
        _
      $region10: #{tpu_custom_call.1} parent=5 // pred_check_branch
        %183 = sbr.rel (%p180) target = $region12
      $region11: #{tpu_custom_call.1} parent=5 // pred_region
        %s184 = ssub.s32 %s18, 1
        // Predicated region
        $region13: #{tpu_custom_call.1} parent=11 // pred_check
          %p185 = pneg %p79
        $region14: #{tpu_custom_call.1} parent=11 // pred_check_branch
          %187 = sbr.rel (%p185) target = $region16
        $region15: #{tpu_custom_call.1} parent=11 // pred_region
          %189 = vsyncadd [#allocation6], 0
          %s190 = sshll.u32 %s1, 4
          %s191 = int_to_ptr.hbm [resolvable:$true] %s190
          %s192 = sshll.u32 [#allocation5], 4
          %s193 = int_to_ptr.vmem [resolvable:$true] %s192
          %198 = dma.hbm_to_vmem [thread:$0]  %s191, 256, %s193, [#allocation6], 64, 64, 4
        $region16: #{tpu_custom_call.1} parent=11 // pred_fallthru
          _
        // Predicated region
        $region17: #{tpu_custom_call.1} parent=11 // pred_check
          %p199 = pneg %p100
        $region18: #{tpu_custom_call.1} parent=11 // pred_check_branch
          %201 = sbr.rel (%p199) target = $region20
        $region19: #{tpu_custom_call.1} parent=11 // pred_region
          _
        $region20: #{tpu_custom_call.1} parent=11 // pred_fallthru
          _
        // Predicated region
        $region21: #{tpu_custom_call.1} parent=11 // pred_check
          %p202 = pneg %p121
        $region22: #{tpu_custom_call.1} parent=11 // pred_check_branch
          %204 = sbr.rel (%p202) target = $region24
        $region23: #{tpu_custom_call.1} parent=11 // pred_region
          %206 = vsyncadd [#allocation6], 0
          %s207 = sshll.u32 %s3, 4
          %s208 = int_to_ptr.hbm [resolvable:$true] %s207
          %s209 = sshll.u32 [#allocation7], 4
          %s210 = int_to_ptr.vmem [resolvable:$true] %s209
          %215 = dma.hbm_to_vmem [thread:$0]  %s208, 256, %s210, [#allocation6], 64, 64, 4
        $region24: #{tpu_custom_call.1} parent=11 // pred_fallthru
          _
        // Predicated region
        $region25: #{tpu_custom_call.1} parent=11 // pred_check
          %p216 = pneg %p142
        $region26: #{tpu_custom_call.1} parent=11 // pred_check_branch
          %218 = sbr.rel (%p216) target = $region28
        $region27: #{tpu_custom_call.1} parent=11 // pred_region
          _
        $region28: #{tpu_custom_call.1} parent=11 // pred_fallthru
          _
      $region12: #{tpu_custom_call.1} parent=5 // pred_fallthru
        _
      %p219 = scmp.lt.s32.totalorder %s18, 4
      // Predicated region
      $region29: #{tpu_custom_call.1} parent=5 // pred_check
        %p220 = pneg %p219
      $region30: #{tpu_custom_call.1} parent=5 // pred_check_branch
        %222 = sbr.rel (%p220) target = $region32
      $region31: #{tpu_custom_call.1} parent=5 // pred_region
        // Predicated region
        $region33: #{tpu_custom_call.1} parent=31 // pred_check
          %p223 = pneg %p52
        $region34: #{tpu_custom_call.1} parent=31 // pred_check_branch
          %225 = sbr.rel (%p223) target = $region36
        $region35: #{tpu_custom_call.1} parent=31 // pred_region
          %s226 = sand.u32 %s42, 1
          %s227 = scalar_lea.sflag [#allocation3], %s226
          %s228 = sand.u32 %s42, 1
          %s229 = smul.addr %s228, 32
          %s230 = scalar_lea.vmem [#allocation2], %s229
          %232 = vsyncadd %s227, 0
          %s233 = smul.addr %s26, 4
          %s234 = smul.addr %s25, 8
          %s235 = sadd.s32 %s233, %s234
          %s236 = smul.addr %s235, 8
          %s237 = scalar_lea.hbm %s0, %s236
          %s239 = sshll.u32 %s237, 4
          %s240 = int_to_ptr.hbm [resolvable:$true] %s239
          %s241 = sshll.u32 %s230, 4
          %s242 = int_to_ptr.vmem [resolvable:$true] %s241
          %244 = dma.hbm_to_vmem [thread:$0]  %s240, 512, %s242, %s227
        $region36: #{tpu_custom_call.1} parent=31 // pred_fallthru
          _
      $region32: #{tpu_custom_call.1} parent=5 // pred_fallthru
        _
      %p245 = scmp.le.s32.totalorder 1, %s18
      %p246 = scmp.lt.s32.totalorder %s18, 5
      %p247 = pnand %p245, %p246
      %p248 = pneg %p247
      // Predicated region
      $region37: #{tpu_custom_call.1} parent=5 // pred_check
        _
      $region38: #{tpu_custom_call.1} parent=5 // pred_check_branch
        %250 = sbr.rel (%p247) target = $region40
      $region39: #{tpu_custom_call.1} parent=5 // pred_region
        %s251 = ssub.s32 %s18, 1
        %s252 = sand.u32 %s45, 1
        %s253 = scalar_lea.sflag [#allocation3], %s252
        %s254 = sand.u32 %s45, 1
        %s255 = smul.addr %s254, 32
        %s256 = scalar_lea.vmem [#allocation2], %s255
        // Predicated region
        $region41: #{tpu_custom_call.1} parent=39 // pred_check
          %p257 = pneg %p58
        $region42: #{tpu_custom_call.1} parent=39 // pred_check_branch
          %259 = sbr.rel (%p257) target = $region44
        $region43: #{tpu_custom_call.1} parent=39 // pred_region
          %261 = dma.done %s253, 512
        $region44: #{tpu_custom_call.1} parent=39 // pred_fallthru
          _
        // Predicated region
        $region45: #{tpu_custom_call.1} parent=39 // pred_check
          %p262 = pneg %p79
        $region46: #{tpu_custom_call.1} parent=39 // pred_check_branch
          %264 = sbr.rel (%p262) target = $region48
        $region47: #{tpu_custom_call.1} parent=39 // pred_region
          %266 = dma.done [#allocation6], 256
        $region48: #{tpu_custom_call.1} parent=39 // pred_fallthru
          _
        // Predicated region
        $region49: #{tpu_custom_call.1} parent=39 // pred_check
          %p267 = pneg %p121
        $region50: #{tpu_custom_call.1} parent=39 // pred_check_branch
          %269 = sbr.rel (%p267) target = $region52
        $region51: #{tpu_custom_call.1} parent=39 // pred_region
          %271 = dma.done [#allocation6], 256
        $region52: #{tpu_custom_call.1} parent=39 // pred_fallthru
          _
        %s272 = sand.u32 %s45, 1
        %s273 = scalar_lea.sflag [#allocation3], %s272
        %s274 = sand.u32 %s45, 1
        %s275 = smul.addr %s274, 32
        %s276 = scalar_lea.vmem [#allocation2], %s275
        %p277 = pneg %p58
        %p278 = pneg %p55
        %p279 = pneg %p79
        %p280 = pneg %p76
        %p281 = pneg %p100
        %p282 = pneg %p97
        %p283 = pneg %p121
        %p284 = pneg %p118
        %p285 = pneg %p142
        %p286 = pneg %p139
        %p287 = pneg %p170
        %p288 = pneg %p167
        %s289 = sand.u32 %s157, 1
        %s290 = scalar_lea.sflag [#allocation4], %s289
        %s291 = sand.u32 %s157, 1
        %s292 = smul.addr %s291, 32
        %s293 = scalar_lea.vmem [#allocation8], %s292
        %v295 = vld [vmem:[%s256] sm:$0xff]
        %v296 = vld [vmem:[%s256 + $0x8] sm:$0xff]
        %v297 = vld [vmem:[%s256 + $0x10] sm:$0xff]
        %v298 = vld [vmem:[%s256 + $0x18] sm:$0xff]
        %300 = vrot.lane.b32.xlu0 %v295, 96
        %v301 = vpop.permute.xlu0 %300
        %303 = vrot.lane.b32.xlu0 %v295, 64
        %v304 = vpop.permute.xlu0 %303
        %306 = vrot.lane.b32.xlu0 %v295, 32
        %v307 = vpop.permute.xlu0 %306
        %310 = vrot.lane.b32.xlu0 %v296, 96
        %v311 = vpop.permute.xlu0 %310
        %313 = vrot.lane.b32.xlu0 %v296, 64
        %v314 = vpop.permute.xlu0 %313
        %316 = vrot.lane.b32.xlu0 %v296, 32
        %v317 = vpop.permute.xlu0 %316
        %320 = vrot.lane.b32.xlu0 %v297, 96
        %v321 = vpop.permute.xlu0 %320
        %323 = vrot.lane.b32.xlu0 %v297, 64
        %v324 = vpop.permute.xlu0 %323
        %326 = vrot.lane.b32.xlu0 %v297, 32
        %v327 = vpop.permute.xlu0 %326
        %330 = vrot.lane.b32.xlu0 %v298, 96
        %v331 = vpop.permute.xlu0 %330
        %333 = vrot.lane.b32.xlu0 %v298, 64
        %v334 = vpop.permute.xlu0 %333
        %336 = vrot.lane.b32.xlu0 %v298, 32
        %v337 = vpop.permute.xlu0 %336
        %vm339 = vcmask 261120
        %v340 = vsel %vm339, %v295, 0.0
        %341 = vadd.xlane.f32.xlu0 %v340
        %v342 = vpop.xlane.xlu0 %341
        %v343 = vsel %vm339, %v301, 0.0
        %344 = vadd.xlane.f32.xlu0 %v343
        %v345 = vpop.xlane.xlu0 %344
        %v346 = vsel %vm339, %v304, 0.0
        %347 = vadd.xlane.f32.xlu0 %v346
        %v348 = vpop.xlane.xlu0 %347
        %v349 = vsel %vm339, %v307, 0.0
        %350 = vadd.xlane.f32.xlu0 %v349
        %v351 = vpop.xlane.xlu0 %350
        %v352 = vsel %vm339, %v296, 0.0
        %353 = vadd.xlane.f32.xlu0 %v352
        %v354 = vpop.xlane.xlu0 %353
        %v355 = vsel %vm339, %v311, 0.0
        %356 = vadd.xlane.f32.xlu0 %v355
        %v357 = vpop.xlane.xlu0 %356
        %v358 = vsel %vm339, %v314, 0.0
        %359 = vadd.xlane.f32.xlu0 %v358
        %v360 = vpop.xlane.xlu0 %359
        %v361 = vsel %vm339, %v317, 0.0
        %362 = vadd.xlane.f32.xlu0 %v361
        %v363 = vpop.xlane.xlu0 %362
        %v364 = vsel %vm339, %v297, 0.0
        %365 = vadd.xlane.f32.xlu0 %v364
        %v366 = vpop.xlane.xlu0 %365
        %v367 = vsel %vm339, %v321, 0.0
        %368 = vadd.xlane.f32.xlu0 %v367
        %v369 = vpop.xlane.xlu0 %368
        %v370 = vsel %vm339, %v324, 0.0
        %371 = vadd.xlane.f32.xlu0 %v370
        %v372 = vpop.xlane.xlu0 %371
        %v373 = vsel %vm339, %v327, 0.0
        %374 = vadd.xlane.f32.xlu0 %v373
        %v375 = vpop.xlane.xlu0 %374
        %v376 = vsel %vm339, %v298, 0.0
        %377 = vadd.xlane.f32.xlu0 %v376
        %v378 = vpop.xlane.xlu0 %377
        %v379 = vsel %vm339, %v331, 0.0
        %380 = vadd.xlane.f32.xlu0 %v379
        %v381 = vpop.xlane.xlu0 %380
        %v382 = vsel %vm339, %v334, 0.0
        %383 = vadd.xlane.f32.xlu0 %v382
        %v384 = vpop.xlane.xlu0 %383
        %v385 = vsel %vm339, %v337, 0.0
        %386 = vadd.xlane.f32.xlu0 %v385
        %v387 = vpop.xlane.xlu0 %386
        %v388 = vrcp.pop 32.0
        %v389 = vmul.f32 32.0, %v388
        %v390 = vsub.f32 1.0, %v389
        %v391 = vmul.f32 %v388, %v390
        %v392 = vadd.f32 %v388, %v391
        %vm393 = vweird.f32 %v388
        %v394 = vsel %vm393, %v388, %v392
        %v395 = vmul.f32 %v342, %v394
        %v396 = vmul.f32 %v345, %v394
        %v397 = vmul.f32 %v348, %v394
        %v398 = vmul.f32 %v351, %v394
        %v399 = vmul.f32 %v354, %v394
        %v400 = vmul.f32 %v357, %v394
        %v401 = vmul.f32 %v360, %v394
        %v402 = vmul.f32 %v363, %v394
        %v403 = vmul.f32 %v366, %v394
        %v404 = vmul.f32 %v369, %v394
        %v405 = vmul.f32 %v372, %v394
        %v406 = vmul.f32 %v375, %v394
        %v407 = vmul.f32 %v378, %v394
        %v408 = vmul.f32 %v381, %v394
        %v409 = vmul.f32 %v384, %v394
        %v410 = vmul.f32 %v387, %v394
        %v411 = vsub.f32 %v295, %v395
        %v412 = vsub.f32 %v301, %v396
        %v413 = vsub.f32 %v304, %v397
        %v414 = vsub.f32 %v307, %v398
        %v415 = vsub.f32 %v296, %v399
        %v416 = vsub.f32 %v311, %v400
        %v417 = vsub.f32 %v314, %v401
        %v418 = vsub.f32 %v317, %v402
        %v419 = vsub.f32 %v297, %v403
        %v420 = vsub.f32 %v321, %v404
        %v421 = vsub.f32 %v324, %v405
        %v422 = vsub.f32 %v327, %v406
        %v423 = vsub.f32 %v298, %v407
        %v424 = vsub.f32 %v331, %v408
        %v425 = vsub.f32 %v334, %v409
        %v426 = vsub.f32 %v337, %v410
        %v427 = vmul.f32 %v411, %v411
        %v428 = vmul.f32 %v412, %v412
        %v429 = vmul.f32 %v413, %v413
        %v430 = vmul.f32 %v414, %v414
        %v431 = vmul.f32 %v415, %v415
        %v432 = vmul.f32 %v416, %v416
        %v433 = vmul.f32 %v417, %v417
        %v434 = vmul.f32 %v418, %v418
        %v435 = vmul.f32 %v419, %v419
        %v436 = vmul.f32 %v420, %v420
        %v437 = vmul.f32 %v421, %v421
        %v438 = vmul.f32 %v422, %v422
        %v439 = vmul.f32 %v423, %v423
        %v440 = vmul.f32 %v424, %v424
        %v441 = vmul.f32 %v425, %v425
        %v442 = vmul.f32 %v426, %v426
        %v443 = vsel %vm339, %v427, 0.0
        %444 = vadd.xlane.f32.xlu0 %v443
        %v445 = vpop.xlane.xlu0 %444
        %v446 = vsel %vm339, %v428, 0.0
        %447 = vadd.xlane.f32.xlu0 %v446
        %v448 = vpop.xlane.xlu0 %447
        %v449 = vsel %vm339, %v429, 0.0
        %450 = vadd.xlane.f32.xlu0 %v449
        %v451 = vpop.xlane.xlu0 %450
        %v452 = vsel %vm339, %v430, 0.0
        %453 = vadd.xlane.f32.xlu0 %v452
        %v454 = vpop.xlane.xlu0 %453
        %v455 = vsel %vm339, %v431, 0.0
        %456 = vadd.xlane.f32.xlu0 %v455
        %v457 = vpop.xlane.xlu0 %456
        %v458 = vsel %vm339, %v432, 0.0
        %459 = vadd.xlane.f32.xlu0 %v458
        %v460 = vpop.xlane.xlu0 %459
        %v461 = vsel %vm339, %v433, 0.0
        %462 = vadd.xlane.f32.xlu0 %v461
        %v463 = vpop.xlane.xlu0 %462
        %v464 = vsel %vm339, %v434, 0.0
        %465 = vadd.xlane.f32.xlu0 %v464
        %v466 = vpop.xlane.xlu0 %465
        %v467 = vsel %vm339, %v435, 0.0
        %468 = vadd.xlane.f32.xlu0 %v467
        %v469 = vpop.xlane.xlu0 %468
        %v470 = vsel %vm339, %v436, 0.0
        %471 = vadd.xlane.f32.xlu0 %v470
        %v472 = vpop.xlane.xlu0 %471
        %v473 = vsel %vm339, %v437, 0.0
        %474 = vadd.xlane.f32.xlu0 %v473
        %v475 = vpop.xlane.xlu0 %474
        %v476 = vsel %vm339, %v438, 0.0
        %477 = vadd.xlane.f32.xlu0 %v476
        %v478 = vpop.xlane.xlu0 %477
        %v479 = vsel %vm339, %v439, 0.0
        %480 = vadd.xlane.f32.xlu0 %v479
        %v481 = vpop.xlane.xlu0 %480
        %v482 = vsel %vm339, %v440, 0.0
        %483 = vadd.xlane.f32.xlu0 %v482
        %v484 = vpop.xlane.xlu0 %483
        %v485 = vsel %vm339, %v441, 0.0
        %486 = vadd.xlane.f32.xlu0 %v485
        %v487 = vpop.xlane.xlu0 %486
        %v488 = vsel %vm339, %v442, 0.0
        %489 = vadd.xlane.f32.xlu0 %v488
        %v490 = vpop.xlane.xlu0 %489
        %v491 = vmul.f32 %v445, %v394
        %v492 = vmul.f32 %v448, %v394
        %v493 = vmul.f32 %v451, %v394
        %v494 = vmul.f32 %v454, %v394
        %v495 = vmul.f32 %v457, %v394
        %v496 = vmul.f32 %v460, %v394
        %v497 = vmul.f32 %v463, %v394
        %v498 = vmul.f32 %v466, %v394
        %v499 = vmul.f32 %v469, %v394
        %v500 = vmul.f32 %v472, %v394
        %v501 = vmul.f32 %v475, %v394
        %v502 = vmul.f32 %v478, %v394
        %v503 = vmul.f32 %v481, %v394
        %v504 = vmul.f32 %v484, %v394
        %v505 = vmul.f32 %v487, %v394
        %v506 = vmul.f32 %v490, %v394
        %v507 = vadd.f32 %v491, 1e-05
        %v508 = vadd.f32 %v492, 1e-05
        %v509 = vadd.f32 %v493, 1e-05
        %v510 = vadd.f32 %v494, 1e-05
        %v511 = vadd.f32 %v495, 1e-05
        %v512 = vadd.f32 %v496, 1e-05
        %v513 = vadd.f32 %v497, 1e-05
        %v514 = vadd.f32 %v498, 1e-05
        %v515 = vadd.f32 %v499, 1e-05
        %v516 = vadd.f32 %v500, 1e-05
        %v517 = vadd.f32 %v501, 1e-05
        %v518 = vadd.f32 %v502, 1e-05
        %v519 = vadd.f32 %v503, 1e-05
        %v520 = vadd.f32 %v504, 1e-05
        %v521 = vadd.f32 %v505, 1e-05
        %v522 = vadd.f32 %v506, 1e-05
        %v523 = vrsqrt.pop %v507
        %v524 = vmul.f32 %v523, %v507
        %v525 = vmul.f32 %v524, %v523
        %v526 = vmul.f32 0.5, %v525
        %v527 = vsub.f32 1.5, %v526
        %v528 = vmul.f32 %v523, %v527
        %vm529 = vweird.f32 %v507
        %vm530 = vweird.f32 %v523
        %vm531 = vmor %vm529, %vm530
        %v532 = vsel %vm531, %v523, %v528
        %v533 = vrsqrt.pop %v508
        %v534 = vmul.f32 %v533, %v508
        %v535 = vmul.f32 %v534, %v533
        %v536 = vmul.f32 0.5, %v535
        %v537 = vsub.f32 1.5, %v536
        %v538 = vmul.f32 %v533, %v537
        %vm539 = vweird.f32 %v508
        %vm540 = vweird.f32 %v533
        %vm541 = vmor %vm539, %vm540
        %v542 = vsel %vm541, %v533, %v538
        %v543 = vrsqrt.pop %v509
        %v544 = vmul.f32 %v543, %v509
        %v545 = vmul.f32 %v544, %v543
        %v546 = vmul.f32 0.5, %v545
        %v547 = vsub.f32 1.5, %v546
        %v548 = vmul.f32 %v543, %v547
        %vm549 = vweird.f32 %v509
        %vm550 = vweird.f32 %v543
        %vm551 = vmor %vm549, %vm550
        %v552 = vsel %vm551, %v543, %v548
        %v553 = vrsqrt.pop %v510
        %v554 = vmul.f32 %v553, %v510
        %v555 = vmul.f32 %v554, %v553
        %v556 = vmul.f32 0.5, %v555
        %v557 = vsub.f32 1.5, %v556
        %v558 = vmul.f32 %v553, %v557
        %vm559 = vweird.f32 %v510
        %vm560 = vweird.f32 %v553
        %vm561 = vmor %vm559, %vm560
        %v562 = vsel %vm561, %v553, %v558
        %v563 = vrsqrt.pop %v511
        %v564 = vmul.f32 %v563, %v511
        %v565 = vmul.f32 %v564, %v563
        %v566 = vmul.f32 0.5, %v565
        %v567 = vsub.f32 1.5, %v566
        %v568 = vmul.f32 %v563, %v567
        %vm569 = vweird.f32 %v511
        %vm570 = vweird.f32 %v563
        %vm571 = vmor %vm569, %vm570
        %v572 = vsel %vm571, %v563, %v568
        %v573 = vrsqrt.pop %v512
        %v574 = vmul.f32 %v573, %v512
        %v575 = vmul.f32 %v574, %v573
        %v576 = vmul.f32 0.5, %v575
        %v577 = vsub.f32 1.5, %v576
        %v578 = vmul.f32 %v573, %v577
        %vm579 = vweird.f32 %v512
        %vm580 = vweird.f32 %v573
        %vm581 = vmor %vm579, %vm580
        %v582 = vsel %vm581, %v573, %v578
        %v583 = vrsqrt.pop %v513
        %v584 = vmul.f32 %v583, %v513
        %v585 = vmul.f32 %v584, %v583
        %v586 = vmul.f32 0.5, %v585
        %v587 = vsub.f32 1.5, %v586
        %v588 = vmul.f32 %v583, %v587
        %vm589 = vweird.f32 %v513
        %vm590 = vweird.f32 %v583
        %vm591 = vmor %vm589, %vm590
        %v592 = vsel %vm591, %v583, %v588
        %v593 = vrsqrt.pop %v514
        %v594 = vmul.f32 %v593, %v514
        %v595 = vmul.f32 %v594, %v593
        %v596 = vmul.f32 0.5, %v595
        %v597 = vsub.f32 1.5, %v596
        %v598 = vmul.f32 %v593, %v597
        %vm599 = vweird.f32 %v514
        %vm600 = vweird.f32 %v593
        %vm601 = vmor %vm599, %vm600
        %v602 = vsel %vm601, %v593, %v598
        %v603 = vrsqrt.pop %v515
        %v604 = vmul.f32 %v603, %v515
        %v605 = vmul.f32 %v604, %v603
        %v606 = vmul.f32 0.5, %v605
        %v607 = vsub.f32 1.5, %v606
        %v608 = vmul.f32 %v603, %v607
        %vm609 = vweird.f32 %v515
        %vm610 = vweird.f32 %v603
        %vm611 = vmor %vm609, %vm610
        %v612 = vsel %vm611, %v603, %v608
        %v613 = vrsqrt.pop %v516
        %v614 = vmul.f32 %v613, %v516
        %v615 = vmul.f32 %v614, %v613
        %v616 = vmul.f32 0.5, %v615
        %v617 = vsub.f32 1.5, %v616
        %v618 = vmul.f32 %v613, %v617
        %vm619 = vweird.f32 %v516
        %vm620 = vweird.f32 %v613
        %vm621 = vmor %vm619, %vm620
        %v622 = vsel %vm621, %v613, %v618
        %v623 = vrsqrt.pop %v517
        %v624 = vmul.f32 %v623, %v517
        %v625 = vmul.f32 %v624, %v623
        %v626 = vmul.f32 0.5, %v625
        %v627 = vsub.f32 1.5, %v626
        %v628 = vmul.f32 %v623, %v627
        %vm629 = vweird.f32 %v517
        %vm630 = vweird.f32 %v623
        %vm631 = vmor %vm629, %vm630
        %v632 = vsel %vm631, %v623, %v628
        %v633 = vrsqrt.pop %v518
        %v634 = vmul.f32 %v633, %v518
        %v635 = vmul.f32 %v634, %v633
        %v636 = vmul.f32 0.5, %v635
        %v637 = vsub.f32 1.5, %v636
        %v638 = vmul.f32 %v633, %v637
        %vm639 = vweird.f32 %v518
        %vm640 = vweird.f32 %v633
        %vm641 = vmor %vm639, %vm640
        %v642 = vsel %vm641, %v633, %v638
        %v643 = vrsqrt.pop %v519
        %v644 = vmul.f32 %v643, %v519
        %v645 = vmul.f32 %v644, %v643
        %v646 = vmul.f32 0.5, %v645
        %v647 = vsub.f32 1.5, %v646
        %v648 = vmul.f32 %v643, %v647
        %vm649 = vweird.f32 %v519
        %vm650 = vweird.f32 %v643
        %vm651 = vmor %vm649, %vm650
        %v652 = vsel %vm651, %v643, %v648
        %v653 = vrsqrt.pop %v520
        %v654 = vmul.f32 %v653, %v520
        %v655 = vmul.f32 %v654, %v653
        %v656 = vmul.f32 0.5, %v655
        %v657 = vsub.f32 1.5, %v656
        %v658 = vmul.f32 %v653, %v657
        %vm659 = vweird.f32 %v520
        %vm660 = vweird.f32 %v653
        %vm661 = vmor %vm659, %vm660
        %v662 = vsel %vm661, %v653, %v658
        %v663 = vrsqrt.pop %v521
        %v664 = vmul.f32 %v663, %v521
        %v665 = vmul.f32 %v664, %v663
        %v666 = vmul.f32 0.5, %v665
        %v667 = vsub.f32 1.5, %v666
        %v668 = vmul.f32 %v663, %v667
        %vm669 = vweird.f32 %v521
        %vm670 = vweird.f32 %v663
        %vm671 = vmor %vm669, %vm670
        %v672 = vsel %vm671, %v663, %v668
        %v673 = vrsqrt.pop %v522
        %v674 = vmul.f32 %v673, %v522
        %v675 = vmul.f32 %v674, %v673
        %v676 = vmul.f32 0.5, %v675
        %v677 = vsub.f32 1.5, %v676
        %v678 = vmul.f32 %v673, %v677
        %vm679 = vweird.f32 %v522
        %vm680 = vweird.f32 %v673
        %vm681 = vmor %vm679, %vm680
        %v682 = vsel %vm681, %v673, %v678
        %v683 = vmul.f32 %v411, %v532
        %v684 = vmul.f32 %v412, %v542
        %v685 = vmul.f32 %v413, %v552
        %v686 = vmul.f32 %v414, %v562
        %v687 = vmul.f32 %v415, %v572
        %v688 = vmul.f32 %v416, %v582
        %v689 = vmul.f32 %v417, %v592
        %v690 = vmul.f32 %v418, %v602
        %v691 = vmul.f32 %v419, %v612
        %v692 = vmul.f32 %v420, %v622
        %v693 = vmul.f32 %v421, %v632
        %v694 = vmul.f32 %v422, %v642
        %v695 = vmul.f32 %v423, %v652
        %v696 = vmul.f32 %v424, %v662
        %v697 = vmul.f32 %v425, %v672
        %v698 = vmul.f32 %v426, %v682
        %v699 = vpack.c.bf16 %v684, %v683
        %v700 = vpack.c.bf16 %v686, %v685
        %v701 = vpack.c.bf16 %v688, %v687
        %v702 = vpack.c.bf16 %v690, %v689
        %v703 = vpack.c.bf16 %v692, %v691
        %v704 = vpack.c.bf16 %v694, %v693
        %v705 = vpack.c.bf16 %v696, %v695
        %v706 = vpack.c.bf16 %v698, %v697
        %v707 = vld [vmem:[#allocation5] sm:$0xf]
        %v708 = vld [vmem:[#allocation5 + $0x4] sm:$0xf]
        %v709 = vld [vmem:[#allocation5 + $0x8] sm:$0xf]
        %v710 = vld [vmem:[#allocation5 + $0xc] sm:$0xf]
        %v711 = vld [vmem:[%s2] sm:$0x1]
        %v713 = vperm.slane %v711, 0
        %v719 = vunpack.c.l.b16 %v707
        %v720 = vunpack.c.l.b16 %v708
        %v721 = vunpack.c.l.b16 %v709
        %v722 = vunpack.c.l.b16 %v710
        %v723 = vpack.c.b16 %v720, %v719
        %v724 = vpack.c.b16 %v722, %v721
        %v728 = vsel %vm339, %v699, 0
        %v731 = vsel %vm339, %v700, 0
        %v734 = vsel %vm339, %v701, 0
        %v737 = vsel %vm339, %v702, 0
        %v740 = vsel %vm339, %v703, 0
        %v743 = vsel %vm339, %v704, 0
        %v746 = vsel %vm339, %v705, 0
        %v749 = vsel %vm339, %v706, 0
        %751 = vmatpush.bf16.msra.mxu0 0
        %752 = vmatpush.bf16.msra.mxu0 0
        %753 = vmatpush.bf16.msra.mxu0 0
        %754 = vmatpush.bf16.msra.mxu0 0
        %755 = vmatpush.bf16.msra.mxu0 0
        %756 = vmatpush.bf16.msra.mxu0 0
        %757 = vmatpush.bf16.msra.mxu0 %v724
        %758 = vmatpush.bf16.msra.mxu0 %v723
        %759 = vmatmul.bf16.gmra.mxu0 %v728
        %v760 = vpop.f32.mrf.mxu0
        %v761 = vadd.f32 %v713, %v760
        %v762 = vpop.f32.mrf.mxu0
        %v763 = vadd.f32 %v713, %v762
        %764 = vmatmul.bf16.gmra.mxu0 %v731
        %v765 = vpop.f32.mrf.mxu0
        %v766 = vadd.f32 %v713, %v765
        %v767 = vpop.f32.mrf.mxu0
        %v768 = vadd.f32 %v713, %v767
        %769 = vmatmul.bf16.gmra.mxu0 %v734
        %v770 = vpop.f32.mrf.mxu0
        %v771 = vadd.f32 %v713, %v770
        %v772 = vpop.f32.mrf.mxu0
        %v773 = vadd.f32 %v713, %v772
        %774 = vmatmul.bf16.gmra.mxu0 %v737
        %v775 = vpop.f32.mrf.mxu0
        %v776 = vadd.f32 %v713, %v775
        %v777 = vpop.f32.mrf.mxu0
        %v778 = vadd.f32 %v713, %v777
        %779 = vmatmul.bf16.gmra.mxu0 %v740
        %v780 = vpop.f32.mrf.mxu0
        %v781 = vadd.f32 %v713, %v780
        %v782 = vpop.f32.mrf.mxu0
        %v783 = vadd.f32 %v713, %v782
        %784 = vmatmul.bf16.gmra.mxu0 %v743
        %v785 = vpop.f32.mrf.mxu0
        %v786 = vadd.f32 %v713, %v785
        %v787 = vpop.f32.mrf.mxu0
        %v788 = vadd.f32 %v713, %v787
        %789 = vmatmul.bf16.gmra.mxu0 %v746
        %v790 = vpop.f32.mrf.mxu0
        %v791 = vadd.f32 %v713, %v790
        %v792 = vpop.f32.mrf.mxu0
        %v793 = vadd.f32 %v713, %v792
        %794 = vmatmul.bf16.gmra.mxu0 %v749
        %v795 = vpop.f32.mrf.mxu0
        %v796 = vadd.f32 %v713, %v795
        %v797 = vpop.f32.mrf.mxu0
        %v798 = vadd.f32 %v713, %v797
        %799 = vdwg.mxu0
        %v800 = vpack.c.bf16 %v763, %v761
        %v801 = vpack.c.bf16 %v768, %v766
        %v802 = vpack.c.bf16 %v773, %v771
        %v803 = vpack.c.bf16 %v778, %v776
        %808 = vrot.lane.b32.xlu0 %v800, 96
        %v809 = vpop.permute.xlu0 %808
        %810 = vrot.lane.b32.xlu0 %v801, 96
        %v811 = vpop.permute.xlu0 %810
        %812 = vrot.lane.b32.xlu0 %v802, 96
        %v813 = vpop.permute.xlu0 %812
        %814 = vrot.lane.b32.xlu0 %v803, 96
        %v815 = vpop.permute.xlu0 %814
        %vm816 = vcmask 64512
        %v818 = vsel %vm816, %v800, 0
        %v821 = vsel %vm816, %v801, 0
        %v824 = vsel %vm816, %v802, 0
        %v827 = vsel %vm816, %v803, 0
        %v830 = vsel %vm816, %v809, 0
        %v833 = vsel %vm816, %v811, 0
        %v836 = vsel %vm816, %v813, 0
        %v839 = vsel %vm816, %v815, 0
        %841 = vmatpush.bf16.xpose.msra.mxu0 0
        %842 = vmatpush.bf16.xpose.msra.mxu0 0
        %843 = vmatpush.bf16.xpose.msra.mxu0 0
        %844 = vmatpush.bf16.xpose.msra.mxu0 0
        %845 = vmatpush.bf16.xpose.msra.mxu0 %v839
        %846 = vmatpush.bf16.xpose.msra.mxu0 %v836
        %847 = vmatpush.bf16.xpose.msra.mxu0 %v833
        %848 = vmatpush.bf16.xpose.msra.mxu0 %v830
        %849 = vmatmul.bf16.gmra.mxu0 %v818
        %v850 = vpop.f32.mrf.mxu0
        %v851 = vadd.f32 0.0, %v850
        %v852 = vpop.f32.mrf.mxu0
        %v853 = vadd.f32 0.0, %v852
        %854 = vmatmul.bf16.gmra.mxu0 %v821
        %v855 = vpop.f32.mrf.mxu0
        %v856 = vadd.f32 0.0, %v855
        %v857 = vpop.f32.mrf.mxu0
        %v858 = vadd.f32 0.0, %v857
        %859 = vmatmul.bf16.gmra.mxu0 %v824
        %v860 = vpop.f32.mrf.mxu0
        %v861 = vadd.f32 0.0, %v860
        %v862 = vpop.f32.mrf.mxu0
        %v863 = vadd.f32 0.0, %v862
        %864 = vmatmul.bf16.gmra.mxu0 %v827
        %v865 = vpop.f32.mrf.mxu0
        %v866 = vadd.f32 0.0, %v865
        %v867 = vpop.f32.mrf.mxu0
        %v868 = vadd.f32 0.0, %v867
        %869 = vdwg.mxu0
        %vm870 = vcmask 523264
        %v871 = vsel %vm870, %v851, -inf
        %872 = vmax.xlane.f32.xlu0 %v871
        %v873 = vpop.xlane.xlu0 %872
        %v874 = vsel %vm870, %v853, -inf
        %875 = vmax.xlane.f32.xlu0 %v874
        %v876 = vpop.xlane.xlu0 %875
        %v877 = vsel %vm870, %v856, -inf
        %878 = vmax.xlane.f32.xlu0 %v877
        %v879 = vpop.xlane.xlu0 %878
        %v880 = vsel %vm870, %v858, -inf
        %881 = vmax.xlane.f32.xlu0 %v880
        %v882 = vpop.xlane.xlu0 %881
        %v883 = vsel %vm870, %v861, -inf
        %884 = vmax.xlane.f32.xlu0 %v883
        %v885 = vpop.xlane.xlu0 %884
        %v886 = vsel %vm870, %v863, -inf
        %887 = vmax.xlane.f32.xlu0 %v886
        %v888 = vpop.xlane.xlu0 %887
        %v889 = vsel %vm870, %v866, -inf
        %890 = vmax.xlane.f32.xlu0 %v889
        %v891 = vpop.xlane.xlu0 %890
        %v892 = vsel %vm870, %v868, -inf
        %893 = vmax.xlane.f32.xlu0 %v892
        %v894 = vpop.xlane.xlu0 %893
        %v895 = vsub.f32 %v851, %v873
        %v896 = vsub.f32 %v853, %v876
        %v897 = vsub.f32 %v856, %v879
        %v898 = vsub.f32 %v858, %v882
        %v899 = vsub.f32 %v861, %v885
        %v900 = vsub.f32 %v863, %v888
        %v901 = vsub.f32 %v866, %v891
        %v902 = vsub.f32 %v868, %v894
        %v903 = vmul.f32 %v895, 1.442695
        %v904 = vpow.pop %v903
        %v905 = vmul.f32 %v896, 1.442695
        %v906 = vpow.pop %v905
        %v907 = vmul.f32 %v897, 1.442695
        %v908 = vpow.pop %v907
        %v909 = vmul.f32 %v898, 1.442695
        %v910 = vpow.pop %v909
        %v911 = vmul.f32 %v899, 1.442695
        %v912 = vpow.pop %v911
        %v913 = vmul.f32 %v900, 1.442695
        %v914 = vpow.pop %v913
        %v915 = vmul.f32 %v901, 1.442695
        %v916 = vpow.pop %v915
        %v917 = vmul.f32 %v902, 1.442695
        %v918 = vpow.pop %v917
        %v919 = vsel %vm870, %v904, 0.0
        %920 = vadd.xlane.f32.xlu0 %v919
        %v921 = vpop.xlane.xlu0 %920
        %v922 = vsel %vm870, %v906, 0.0
        %923 = vadd.xlane.f32.xlu0 %v922
        %v924 = vpop.xlane.xlu0 %923
        %v925 = vsel %vm870, %v908, 0.0
        %926 = vadd.xlane.f32.xlu0 %v925
        %v927 = vpop.xlane.xlu0 %926
        %v928 = vsel %vm870, %v910, 0.0
        %929 = vadd.xlane.f32.xlu0 %v928
        %v930 = vpop.xlane.xlu0 %929
        %v931 = vsel %vm870, %v912, 0.0
        %932 = vadd.xlane.f32.xlu0 %v931
        %v933 = vpop.xlane.xlu0 %932
        %v934 = vsel %vm870, %v914, 0.0
        %935 = vadd.xlane.f32.xlu0 %v934
        %v936 = vpop.xlane.xlu0 %935
        %v937 = vsel %vm870, %v916, 0.0
        %938 = vadd.xlane.f32.xlu0 %v937
        %v939 = vpop.xlane.xlu0 %938
        %v940 = vsel %vm870, %v918, 0.0
        %941 = vadd.xlane.f32.xlu0 %v940
        %v942 = vpop.xlane.xlu0 %941
        %v943 = vrcp.pop %v921
        %v944 = vrcp.pop %v924
        %v945 = vrcp.pop %v927
        %v946 = vrcp.pop %v930
        %v947 = vrcp.pop %v933
        %v948 = vrcp.pop %v936
        %v949 = vrcp.pop %v939
        %v950 = vrcp.pop %v942
        %v951 = vmul.f32 %v904, %v943
        %v952 = vmul.f32 %v906, %v944
        %v953 = vmul.f32 %v908, %v945
        %v954 = vmul.f32 %v910, %v946
        %v955 = vmul.f32 %v912, %v947
        %v956 = vmul.f32 %v914, %v948
        %v957 = vmul.f32 %v916, %v949
        %v958 = vmul.f32 %v918, %v950
        %v959 = vpack.c.bf16 %v952, %v951
        %v960 = vpack.c.bf16 %v954, %v953
        %v961 = vpack.c.bf16 %v956, %v955
        %v962 = vpack.c.bf16 %v958, %v957
        %963 = vrot.lane.b32.xlu0 %v800, 64
        %v964 = vpop.permute.xlu0 %963
        %965 = vrot.lane.b32.xlu0 %v801, 64
        %v966 = vpop.permute.xlu0 %965
        %967 = vrot.lane.b32.xlu0 %v802, 64
        %v968 = vpop.permute.xlu0 %967
        %969 = vrot.lane.b32.xlu0 %v803, 64
        %v970 = vpop.permute.xlu0 %969
        %v976 = vsel %vm870, %v959, 0
        %v979 = vsel %vm870, %v960, 0
        %v982 = vsel %vm870, %v961, 0
        %v985 = vsel %vm870, %v962, 0
        %987 = vmatpush.bf16.msra.mxu0 0
        %988 = vmatpush.bf16.msra.mxu0 0
        %989 = vmatpush.bf16.msra.mxu0 0
        %990 = vmatpush.bf16.msra.mxu0 0
        %991 = vmatpush.bf16.msra.mxu0 %v970
        %992 = vmatpush.bf16.msra.mxu0 %v968
        %993 = vmatpush.bf16.msra.mxu0 %v966
        %994 = vmatpush.bf16.msra.mxu0 %v964
        %995 = vmatmul.bf16.gmra.mxu0 %v976
        %v996 = vpop.f32.mrf.mxu0
        %v997 = vadd.f32 0.0, %v996
        %v998 = vpop.f32.mrf.mxu0
        %v999 = vadd.f32 0.0, %v998
        %1000 = vmatmul.bf16.gmra.mxu0 %v979
        %v1001 = vpop.f32.mrf.mxu0
        %v1002 = vadd.f32 0.0, %v1001
        %v1003 = vpop.f32.mrf.mxu0
        %v1004 = vadd.f32 0.0, %v1003
        %1005 = vmatmul.bf16.gmra.mxu0 %v982
        %v1006 = vpop.f32.mrf.mxu0
        %v1007 = vadd.f32 0.0, %v1006
        %v1008 = vpop.f32.mrf.mxu0
        %v1009 = vadd.f32 0.0, %v1008
        %1010 = vmatmul.bf16.gmra.mxu0 %v985
        %v1011 = vpop.f32.mrf.mxu0
        %v1012 = vadd.f32 0.0, %v1011
        %v1013 = vpop.f32.mrf.mxu0
        %v1014 = vadd.f32 0.0, %v1013
        %1015 = vdwg.mxu0
        %1016 = vrot.lane.b32.xlu0 %v800, 120
        %v1017 = vpop.permute.xlu0 %1016
        %1018 = vrot.lane.b32.xlu0 %v801, 120
        %v1019 = vpop.permute.xlu0 %1018
        %1020 = vrot.lane.b32.xlu0 %v802, 120
        %v1021 = vpop.permute.xlu0 %1020
        %1022 = vrot.lane.b32.xlu0 %v803, 120
        %v1023 = vpop.permute.xlu0 %1022
        %1024 = vrot.lane.b32.xlu0 %v800, 88
        %v1025 = vpop.permute.xlu0 %1024
        %1026 = vrot.lane.b32.xlu0 %v801, 88
        %v1027 = vpop.permute.xlu0 %1026
        %1028 = vrot.lane.b32.xlu0 %v802, 88
        %v1029 = vpop.permute.xlu0 %1028
        %1030 = vrot.lane.b32.xlu0 %v803, 88
        %v1031 = vpop.permute.xlu0 %1030
        %v1033 = vsel %vm816, %v1017, 0
        %v1036 = vsel %vm816, %v1019, 0
        %v1039 = vsel %vm816, %v1021, 0
        %v1042 = vsel %vm816, %v1023, 0
        %v1045 = vsel %vm816, %v1025, 0
        %v1048 = vsel %vm816, %v1027, 0
        %v1051 = vsel %vm816, %v1029, 0
        %v1054 = vsel %vm816, %v1031, 0
        %1056 = vmatpush.bf16.xpose.msra.mxu0 0
        %1057 = vmatpush.bf16.xpose.msra.mxu0 0
        %1058 = vmatpush.bf16.xpose.msra.mxu0 0
        %1059 = vmatpush.bf16.xpose.msra.mxu0 0
        %1060 = vmatpush.bf16.xpose.msra.mxu0 %v1054
        %1061 = vmatpush.bf16.xpose.msra.mxu0 %v1051
        %1062 = vmatpush.bf16.xpose.msra.mxu0 %v1048
        %1063 = vmatpush.bf16.xpose.msra.mxu0 %v1045
        %1064 = vmatmul.bf16.gmra.mxu0 %v1033
        %v1065 = vpop.f32.mrf.mxu0
        %v1066 = vadd.f32 0.0, %v1065
        %v1067 = vpop.f32.mrf.mxu0
        %v1068 = vadd.f32 0.0, %v1067
        %1069 = vmatmul.bf16.gmra.mxu0 %v1036
        %v1070 = vpop.f32.mrf.mxu0
        %v1071 = vadd.f32 0.0, %v1070
        %v1072 = vpop.f32.mrf.mxu0
        %v1073 = vadd.f32 0.0, %v1072
        %1074 = vmatmul.bf16.gmra.mxu0 %v1039
        %v1075 = vpop.f32.mrf.mxu0
        %v1076 = vadd.f32 0.0, %v1075
        %v1077 = vpop.f32.mrf.mxu0
        %v1078 = vadd.f32 0.0, %v1077
        %1079 = vmatmul.bf16.gmra.mxu0 %v1042
        %v1080 = vpop.f32.mrf.mxu0
        %v1081 = vadd.f32 0.0, %v1080
        %v1082 = vpop.f32.mrf.mxu0
        %v1083 = vadd.f32 0.0, %v1082
        %1084 = vdwg.mxu0
        %v1085 = vsel %vm870, %v1066, -inf
        %1086 = vmax.xlane.f32.xlu0 %v1085
        %v1087 = vpop.xlane.xlu0 %1086
        %v1088 = vsel %vm870, %v1068, -inf
        %1089 = vmax.xlane.f32.xlu0 %v1088
        %v1090 = vpop.xlane.xlu0 %1089
        %v1091 = vsel %vm870, %v1071, -inf
        %1092 = vmax.xlane.f32.xlu0 %v1091
        %v1093 = vpop.xlane.xlu0 %1092
        %v1094 = vsel %vm870, %v1073, -inf
        %1095 = vmax.xlane.f32.xlu0 %v1094
        %v1096 = vpop.xlane.xlu0 %1095
        %v1097 = vsel %vm870, %v1076, -inf
        %1098 = vmax.xlane.f32.xlu0 %v1097
        %v1099 = vpop.xlane.xlu0 %1098
        %v1100 = vsel %vm870, %v1078, -inf
        %1101 = vmax.xlane.f32.xlu0 %v1100
        %v1102 = vpop.xlane.xlu0 %1101
        %v1103 = vsel %vm870, %v1081, -inf
        %1104 = vmax.xlane.f32.xlu0 %v1103
        %v1105 = vpop.xlane.xlu0 %1104
        %v1106 = vsel %vm870, %v1083, -inf
        %1107 = vmax.xlane.f32.xlu0 %v1106
        %v1108 = vpop.xlane.xlu0 %1107
        %v1109 = vsub.f32 %v1066, %v1087
        %v1110 = vsub.f32 %v1068, %v1090
        %v1111 = vsub.f32 %v1071, %v1093
        %v1112 = vsub.f32 %v1073, %v1096
        %v1113 = vsub.f32 %v1076, %v1099
        %v1114 = vsub.f32 %v1078, %v1102
        %v1115 = vsub.f32 %v1081, %v1105
        %v1116 = vsub.f32 %v1083, %v1108
        %v1117 = vmul.f32 %v1109, 1.442695
        %v1118 = vpow.pop %v1117
        %v1119 = vmul.f32 %v1110, 1.442695
        %v1120 = vpow.pop %v1119
        %v1121 = vmul.f32 %v1111, 1.442695
        %v1122 = vpow.pop %v1121
        %v1123 = vmul.f32 %v1112, 1.442695
        %v1124 = vpow.pop %v1123
        %v1125 = vmul.f32 %v1113, 1.442695
        %v1126 = vpow.pop %v1125
        %v1127 = vmul.f32 %v1114, 1.442695
        %v1128 = vpow.pop %v1127
        %v1129 = vmul.f32 %v1115, 1.442695
        %v1130 = vpow.pop %v1129
        %v1131 = vmul.f32 %v1116, 1.442695
        %v1132 = vpow.pop %v1131
        %v1133 = vsel %vm870, %v1118, 0.0
        %1134 = vadd.xlane.f32.xlu0 %v1133
        %v1135 = vpop.xlane.xlu0 %1134
        %v1136 = vsel %vm870, %v1120, 0.0
        %1137 = vadd.xlane.f32.xlu0 %v1136
        %v1138 = vpop.xlane.xlu0 %1137
        %v1139 = vsel %vm870, %v1122, 0.0
        %1140 = vadd.xlane.f32.xlu0 %v1139
        %v1141 = vpop.xlane.xlu0 %1140
        %v1142 = vsel %vm870, %v1124, 0.0
        %1143 = vadd.xlane.f32.xlu0 %v1142
        %v1144 = vpop.xlane.xlu0 %1143
        %v1145 = vsel %vm870, %v1126, 0.0
        %1146 = vadd.xlane.f32.xlu0 %v1145
        %v1147 = vpop.xlane.xlu0 %1146
        %v1148 = vsel %vm870, %v1128, 0.0
        %1149 = vadd.xlane.f32.xlu0 %v1148
        %v1150 = vpop.xlane.xlu0 %1149
        %v1151 = vsel %vm870, %v1130, 0.0
        %1152 = vadd.xlane.f32.xlu0 %v1151
        %v1153 = vpop.xlane.xlu0 %1152
        %v1154 = vsel %vm870, %v1132, 0.0
        %1155 = vadd.xlane.f32.xlu0 %v1154
        %v1156 = vpop.xlane.xlu0 %1155
        %v1157 = vrcp.pop %v1135
        %v1158 = vrcp.pop %v1138
        %v1159 = vrcp.pop %v1141
        %v1160 = vrcp.pop %v1144
        %v1161 = vrcp.pop %v1147
        %v1162 = vrcp.pop %v1150
        %v1163 = vrcp.pop %v1153
        %v1164 = vrcp.pop %v1156
        %v1165 = vmul.f32 %v1118, %v1157
        %v1166 = vmul.f32 %v1120, %v1158
        %v1167 = vmul.f32 %v1122, %v1159
        %v1168 = vmul.f32 %v1124, %v1160
        %v1169 = vmul.f32 %v1126, %v1161
        %v1170 = vmul.f32 %v1128, %v1162
        %v1171 = vmul.f32 %v1130, %v1163
        %v1172 = vmul.f32 %v1132, %v1164
        %v1173 = vpack.c.bf16 %v1166, %v1165
        %v1174 = vpack.c.bf16 %v1168, %v1167
        %v1175 = vpack.c.bf16 %v1170, %v1169
        %v1176 = vpack.c.bf16 %v1172, %v1171
        %1177 = vrot.lane.b32.xlu0 %v800, 56
        %v1178 = vpop.permute.xlu0 %1177
        %1179 = vrot.lane.b32.xlu0 %v801, 56
        %v1180 = vpop.permute.xlu0 %1179
        %1181 = vrot.lane.b32.xlu0 %v802, 56
        %v1182 = vpop.permute.xlu0 %1181
        %1183 = vrot.lane.b32.xlu0 %v803, 56
        %v1184 = vpop.permute.xlu0 %1183
        %v1190 = vsel %vm870, %v1173, 0
        %v1193 = vsel %vm870, %v1174, 0
        %v1196 = vsel %vm870, %v1175, 0
        %v1199 = vsel %vm870, %v1176, 0
        %1201 = vmatpush.bf16.msra.mxu0 0
        %1202 = vmatpush.bf16.msra.mxu0 0
        %1203 = vmatpush.bf16.msra.mxu0 0
        %1204 = vmatpush.bf16.msra.mxu0 0
        %1205 = vmatpush.bf16.msra.mxu0 %v1184
        %1206 = vmatpush.bf16.msra.mxu0 %v1182
        %1207 = vmatpush.bf16.msra.mxu0 %v1180
        %1208 = vmatpush.bf16.msra.mxu0 %v1178
        %1209 = vmatmul.bf16.gmra.mxu0 %v1190
        %v1210 = vpop.f32.mrf.mxu0
        %v1211 = vadd.f32 0.0, %v1210
        %v1212 = vpop.f32.mrf.mxu0
        %v1213 = vadd.f32 0.0, %v1212
        %1214 = vmatmul.bf16.gmra.mxu0 %v1193
        %v1215 = vpop.f32.mrf.mxu0
        %v1216 = vadd.f32 0.0, %v1215
        %v1217 = vpop.f32.mrf.mxu0
        %v1218 = vadd.f32 0.0, %v1217
        %1219 = vmatmul.bf16.gmra.mxu0 %v1196
        %v1220 = vpop.f32.mrf.mxu0
        %v1221 = vadd.f32 0.0, %v1220
        %v1222 = vpop.f32.mrf.mxu0
        %v1223 = vadd.f32 0.0, %v1222
        %1224 = vmatmul.bf16.gmra.mxu0 %v1199
        %v1225 = vpop.f32.mrf.mxu0
        %v1226 = vadd.f32 0.0, %v1225
        %v1227 = vpop.f32.mrf.mxu0
        %v1228 = vadd.f32 0.0, %v1227
        %1229 = vdwg.mxu0
        %1230 = vrot.lane.b32.xlu0 %v800, 112
        %v1231 = vpop.permute.xlu0 %1230
        %1232 = vrot.lane.b32.xlu0 %v801, 112
        %v1233 = vpop.permute.xlu0 %1232
        %1234 = vrot.lane.b32.xlu0 %v802, 112
        %v1235 = vpop.permute.xlu0 %1234
        %1236 = vrot.lane.b32.xlu0 %v803, 112
        %v1237 = vpop.permute.xlu0 %1236
        %1238 = vrot.lane.b32.xlu0 %v800, 80
        %v1239 = vpop.permute.xlu0 %1238
        %1240 = vrot.lane.b32.xlu0 %v801, 80
        %v1241 = vpop.permute.xlu0 %1240
        %1242 = vrot.lane.b32.xlu0 %v802, 80
        %v1243 = vpop.permute.xlu0 %1242
        %1244 = vrot.lane.b32.xlu0 %v803, 80
        %v1245 = vpop.permute.xlu0 %1244
        %v1247 = vsel %vm816, %v1231, 0
        %v1250 = vsel %vm816, %v1233, 0
        %v1253 = vsel %vm816, %v1235, 0
        %v1256 = vsel %vm816, %v1237, 0
        %v1259 = vsel %vm816, %v1239, 0
        %v1262 = vsel %vm816, %v1241, 0
        %v1265 = vsel %vm816, %v1243, 0
        %v1268 = vsel %vm816, %v1245, 0
        %1270 = vmatpush.bf16.xpose.msra.mxu0 0
        %1271 = vmatpush.bf16.xpose.msra.mxu0 0
        %1272 = vmatpush.bf16.xpose.msra.mxu0 0
        %1273 = vmatpush.bf16.xpose.msra.mxu0 0
        %1274 = vmatpush.bf16.xpose.msra.mxu0 %v1268
        %1275 = vmatpush.bf16.xpose.msra.mxu0 %v1265
        %1276 = vmatpush.bf16.xpose.msra.mxu0 %v1262
        %1277 = vmatpush.bf16.xpose.msra.mxu0 %v1259
        %1278 = vmatmul.bf16.gmra.mxu0 %v1247
        %v1279 = vpop.f32.mrf.mxu0
        %v1280 = vadd.f32 0.0, %v1279
        %v1281 = vpop.f32.mrf.mxu0
        %v1282 = vadd.f32 0.0, %v1281
        %1283 = vmatmul.bf16.gmra.mxu0 %v1250
        %v1284 = vpop.f32.mrf.mxu0
        %v1285 = vadd.f32 0.0, %v1284
        %v1286 = vpop.f32.mrf.mxu0
        %v1287 = vadd.f32 0.0, %v1286
        %1288 = vmatmul.bf16.gmra.mxu0 %v1253
        %v1289 = vpop.f32.mrf.mxu0
        %v1290 = vadd.f32 0.0, %v1289
        %v1291 = vpop.f32.mrf.mxu0
        %v1292 = vadd.f32 0.0, %v1291
        %1293 = vmatmul.bf16.gmra.mxu0 %v1256
        %v1294 = vpop.f32.mrf.mxu0
        %v1295 = vadd.f32 0.0, %v1294
        %v1296 = vpop.f32.mrf.mxu0
        %v1297 = vadd.f32 0.0, %v1296
        %1298 = vdwg.mxu0
        %v1299 = vsel %vm870, %v1280, -inf
        %1300 = vmax.xlane.f32.xlu0 %v1299
        %v1301 = vpop.xlane.xlu0 %1300
        %v1302 = vsel %vm870, %v1282, -inf
        %1303 = vmax.xlane.f32.xlu0 %v1302
        %v1304 = vpop.xlane.xlu0 %1303
        %v1305 = vsel %vm870, %v1285, -inf
        %1306 = vmax.xlane.f32.xlu0 %v1305
        %v1307 = vpop.xlane.xlu0 %1306
        %v1308 = vsel %vm870, %v1287, -inf
        %1309 = vmax.xlane.f32.xlu0 %v1308
        %v1310 = vpop.xlane.xlu0 %1309
        %v1311 = vsel %vm870, %v1290, -inf
        %1312 = vmax.xlane.f32.xlu0 %v1311
        %v1313 = vpop.xlane.xlu0 %1312
        %v1314 = vsel %vm870, %v1292, -inf
        %1315 = vmax.xlane.f32.xlu0 %v1314
        %v1316 = vpop.xlane.xlu0 %1315
        %v1317 = vsel %vm870, %v1295, -inf
        %1318 = vmax.xlane.f32.xlu0 %v1317
        %v1319 = vpop.xlane.xlu0 %1318
        %v1320 = vsel %vm870, %v1297, -inf
        %1321 = vmax.xlane.f32.xlu0 %v1320
        %v1322 = vpop.xlane.xlu0 %1321
        %v1323 = vsub.f32 %v1280, %v1301
        %v1324 = vsub.f32 %v1282, %v1304
        %v1325 = vsub.f32 %v1285, %v1307
        %v1326 = vsub.f32 %v1287, %v1310
        %v1327 = vsub.f32 %v1290, %v1313
        %v1328 = vsub.f32 %v1292, %v1316
        %v1329 = vsub.f32 %v1295, %v1319
        %v1330 = vsub.f32 %v1297, %v1322
        %v1331 = vmul.f32 %v1323, 1.442695
        %v1332 = vpow.pop %v1331
        %v1333 = vmul.f32 %v1324, 1.442695
        %v1334 = vpow.pop %v1333
        %v1335 = vmul.f32 %v1325, 1.442695
        %v1336 = vpow.pop %v1335
        %v1337 = vmul.f32 %v1326, 1.442695
        %v1338 = vpow.pop %v1337
        %v1339 = vmul.f32 %v1327, 1.442695
        %v1340 = vpow.pop %v1339
        %v1341 = vmul.f32 %v1328, 1.442695
        %v1342 = vpow.pop %v1341
        %v1343 = vmul.f32 %v1329, 1.442695
        %v1344 = vpow.pop %v1343
        %v1345 = vmul.f32 %v1330, 1.442695
        %v1346 = vpow.pop %v1345
        %v1347 = vsel %vm870, %v1332, 0.0
        %1348 = vadd.xlane.f32.xlu0 %v1347
        %v1349 = vpop.xlane.xlu0 %1348
        %v1350 = vsel %vm870, %v1334, 0.0
        %1351 = vadd.xlane.f32.xlu0 %v1350
        %v1352 = vpop.xlane.xlu0 %1351
        %v1353 = vsel %vm870, %v1336, 0.0
        %1354 = vadd.xlane.f32.xlu0 %v1353
        %v1355 = vpop.xlane.xlu0 %1354
        %v1356 = vsel %vm870, %v1338, 0.0
        %1357 = vadd.xlane.f32.xlu0 %v1356
        %v1358 = vpop.xlane.xlu0 %1357
        %v1359 = vsel %vm870, %v1340, 0.0
        %1360 = vadd.xlane.f32.xlu0 %v1359
        %v1361 = vpop.xlane.xlu0 %1360
        %v1362 = vsel %vm870, %v1342, 0.0
        %1363 = vadd.xlane.f32.xlu0 %v1362
        %v1364 = vpop.xlane.xlu0 %1363
        %v1365 = vsel %vm870, %v1344, 0.0
        %1366 = vadd.xlane.f32.xlu0 %v1365
        %v1367 = vpop.xlane.xlu0 %1366
        %v1368 = vsel %vm870, %v1346, 0.0
        %1369 = vadd.xlane.f32.xlu0 %v1368
        %v1370 = vpop.xlane.xlu0 %1369
        %v1371 = vrcp.pop %v1349
        %v1372 = vrcp.pop %v1352
        %v1373 = vrcp.pop %v1355
        %v1374 = vrcp.pop %v1358
        %v1375 = vrcp.pop %v1361
        %v1376 = vrcp.pop %v1364
        %v1377 = vrcp.pop %v1367
        %v1378 = vrcp.pop %v1370
        %v1379 = vmul.f32 %v1332, %v1371
        %v1380 = vmul.f32 %v1334, %v1372
        %v1381 = vmul.f32 %v1336, %v1373
        %v1382 = vmul.f32 %v1338, %v1374
        %v1383 = vmul.f32 %v1340, %v1375
        %v1384 = vmul.f32 %v1342, %v1376
        %v1385 = vmul.f32 %v1344, %v1377
        %v1386 = vmul.f32 %v1346, %v1378
        %v1387 = vpack.c.bf16 %v1380, %v1379
        %v1388 = vpack.c.bf16 %v1382, %v1381
        %v1389 = vpack.c.bf16 %v1384, %v1383
        %v1390 = vpack.c.bf16 %v1386, %v1385
        %1391 = vrot.lane.b32.xlu0 %v800, 48
        %v1392 = vpop.permute.xlu0 %1391
        %1393 = vrot.lane.b32.xlu0 %v801, 48
        %v1394 = vpop.permute.xlu0 %1393
        %1395 = vrot.lane.b32.xlu0 %v802, 48
        %v1396 = vpop.permute.xlu0 %1395
        %1397 = vrot.lane.b32.xlu0 %v803, 48
        %v1398 = vpop.permute.xlu0 %1397
        %v1404 = vsel %vm870, %v1387, 0
        %v1407 = vsel %vm870, %v1388, 0
        %v1410 = vsel %vm870, %v1389, 0
        %v1413 = vsel %vm870, %v1390, 0
        %1415 = vmatpush.bf16.msra.mxu0 0
        %1416 = vmatpush.bf16.msra.mxu0 0
        %1417 = vmatpush.bf16.msra.mxu0 0
        %1418 = vmatpush.bf16.msra.mxu0 0
        %1419 = vmatpush.bf16.msra.mxu0 %v1398
        %1420 = vmatpush.bf16.msra.mxu0 %v1396
        %1421 = vmatpush.bf16.msra.mxu0 %v1394
        %1422 = vmatpush.bf16.msra.mxu0 %v1392
        %1423 = vmatmul.bf16.gmra.mxu0 %v1404
        %v1424 = vpop.f32.mrf.mxu0
        %v1425 = vadd.f32 0.0, %v1424
        %v1426 = vpop.f32.mrf.mxu0
        %v1427 = vadd.f32 0.0, %v1426
        %1428 = vmatmul.bf16.gmra.mxu0 %v1407
        %v1429 = vpop.f32.mrf.mxu0
        %v1430 = vadd.f32 0.0, %v1429
        %v1431 = vpop.f32.mrf.mxu0
        %v1432 = vadd.f32 0.0, %v1431
        %1433 = vmatmul.bf16.gmra.mxu0 %v1410
        %v1434 = vpop.f32.mrf.mxu0
        %v1435 = vadd.f32 0.0, %v1434
        %v1436 = vpop.f32.mrf.mxu0
        %v1437 = vadd.f32 0.0, %v1436
        %1438 = vmatmul.bf16.gmra.mxu0 %v1413
        %v1439 = vpop.f32.mrf.mxu0
        %v1440 = vadd.f32 0.0, %v1439
        %v1441 = vpop.f32.mrf.mxu0
        %v1442 = vadd.f32 0.0, %v1441
        %1443 = vdwg.mxu0
        %1444 = vrot.lane.b32.xlu0 %v800, 104
        %v1445 = vpop.permute.xlu0 %1444
        %1446 = vrot.lane.b32.xlu0 %v801, 104
        %v1447 = vpop.permute.xlu0 %1446
        %1448 = vrot.lane.b32.xlu0 %v802, 104
        %v1449 = vpop.permute.xlu0 %1448
        %1450 = vrot.lane.b32.xlu0 %v803, 104
        %v1451 = vpop.permute.xlu0 %1450
        %1452 = vrot.lane.b32.xlu0 %v800, 72
        %v1453 = vpop.permute.xlu0 %1452
        %1454 = vrot.lane.b32.xlu0 %v801, 72
        %v1455 = vpop.permute.xlu0 %1454
        %1456 = vrot.lane.b32.xlu0 %v802, 72
        %v1457 = vpop.permute.xlu0 %1456
        %1458 = vrot.lane.b32.xlu0 %v803, 72
        %v1459 = vpop.permute.xlu0 %1458
        %v1461 = vsel %vm816, %v1445, 0
        %v1464 = vsel %vm816, %v1447, 0
        %v1467 = vsel %vm816, %v1449, 0
        %v1470 = vsel %vm816, %v1451, 0
        %v1473 = vsel %vm816, %v1453, 0
        %v1476 = vsel %vm816, %v1455, 0
        %v1479 = vsel %vm816, %v1457, 0
        %v1482 = vsel %vm816, %v1459, 0
        %1484 = vmatpush.bf16.xpose.msra.mxu0 0
        %1485 = vmatpush.bf16.xpose.msra.mxu0 0
        %1486 = vmatpush.bf16.xpose.msra.mxu0 0
        %1487 = vmatpush.bf16.xpose.msra.mxu0 0
        %1488 = vmatpush.bf16.xpose.msra.mxu0 %v1482
        %1489 = vmatpush.bf16.xpose.msra.mxu0 %v1479
        %1490 = vmatpush.bf16.xpose.msra.mxu0 %v1476
        %1491 = vmatpush.bf16.xpose.msra.mxu0 %v1473
        %1492 = vmatmul.bf16.gmra.mxu0 %v1461
        %v1493 = vpop.f32.mrf.mxu0
        %v1494 = vadd.f32 0.0, %v1493
        %v1495 = vpop.f32.mrf.mxu0
        %v1496 = vadd.f32 0.0, %v1495
        %1497 = vmatmul.bf16.gmra.mxu0 %v1464
        %v1498 = vpop.f32.mrf.mxu0
        %v1499 = vadd.f32 0.0, %v1498
        %v1500 = vpop.f32.mrf.mxu0
        %v1501 = vadd.f32 0.0, %v1500
        %1502 = vmatmul.bf16.gmra.mxu0 %v1467
        %v1503 = vpop.f32.mrf.mxu0
        %v1504 = vadd.f32 0.0, %v1503
        %v1505 = vpop.f32.mrf.mxu0
        %v1506 = vadd.f32 0.0, %v1505
        %1507 = vmatmul.bf16.gmra.mxu0 %v1470
        %v1508 = vpop.f32.mrf.mxu0
        %v1509 = vadd.f32 0.0, %v1508
        %v1510 = vpop.f32.mrf.mxu0
        %v1511 = vadd.f32 0.0, %v1510
        %1512 = vdwg.mxu0
        %v1513 = vsel %vm870, %v1494, -inf
        %1514 = vmax.xlane.f32.xlu0 %v1513
        %v1515 = vpop.xlane.xlu0 %1514
        %v1516 = vsel %vm870, %v1496, -inf
        %1517 = vmax.xlane.f32.xlu0 %v1516
        %v1518 = vpop.xlane.xlu0 %1517
        %v1519 = vsel %vm870, %v1499, -inf
        %1520 = vmax.xlane.f32.xlu0 %v1519
        %v1521 = vpop.xlane.xlu0 %1520
        %v1522 = vsel %vm870, %v1501, -inf
        %1523 = vmax.xlane.f32.xlu0 %v1522
        %v1524 = vpop.xlane.xlu0 %1523
        %v1525 = vsel %vm870, %v1504, -inf
        %1526 = vmax.xlane.f32.xlu0 %v1525
        %v1527 = vpop.xlane.xlu0 %1526
        %v1528 = vsel %vm870, %v1506, -inf
        %1529 = vmax.xlane.f32.xlu0 %v1528
        %v1530 = vpop.xlane.xlu0 %1529
        %v1531 = vsel %vm870, %v1509, -inf
        %1532 = vmax.xlane.f32.xlu0 %v1531
        %v1533 = vpop.xlane.xlu0 %1532
        %v1534 = vsel %vm870, %v1511, -inf
        %1535 = vmax.xlane.f32.xlu0 %v1534
        %v1536 = vpop.xlane.xlu0 %1535
        %v1537 = vsub.f32 %v1494, %v1515
        %v1538 = vsub.f32 %v1496, %v1518
        %v1539 = vsub.f32 %v1499, %v1521
        %v1540 = vsub.f32 %v1501, %v1524
        %v1541 = vsub.f32 %v1504, %v1527
        %v1542 = vsub.f32 %v1506, %v1530
        %v1543 = vsub.f32 %v1509, %v1533
        %v1544 = vsub.f32 %v1511, %v1536
        %v1545 = vmul.f32 %v1537, 1.442695
        %v1546 = vpow.pop %v1545
        %v1547 = vmul.f32 %v1538, 1.442695
        %v1548 = vpow.pop %v1547
        %v1549 = vmul.f32 %v1539, 1.442695
        %v1550 = vpow.pop %v1549
        %v1551 = vmul.f32 %v1540, 1.442695
        %v1552 = vpow.pop %v1551
        %v1553 = vmul.f32 %v1541, 1.442695
        %v1554 = vpow.pop %v1553
        %v1555 = vmul.f32 %v1542, 1.442695
        %v1556 = vpow.pop %v1555
        %v1557 = vmul.f32 %v1543, 1.442695
        %v1558 = vpow.pop %v1557
        %v1559 = vmul.f32 %v1544, 1.442695
        %v1560 = vpow.pop %v1559
        %v1561 = vsel %vm870, %v1546, 0.0
        %1562 = vadd.xlane.f32.xlu0 %v1561
        %v1563 = vpop.xlane.xlu0 %1562
        %v1564 = vsel %vm870, %v1548, 0.0
        %1565 = vadd.xlane.f32.xlu0 %v1564
        %v1566 = vpop.xlane.xlu0 %1565
        %v1567 = vsel %vm870, %v1550, 0.0
        %1568 = vadd.xlane.f32.xlu0 %v1567
        %v1569 = vpop.xlane.xlu0 %1568
        %v1570 = vsel %vm870, %v1552, 0.0
        %1571 = vadd.xlane.f32.xlu0 %v1570
        %v1572 = vpop.xlane.xlu0 %1571
        %v1573 = vsel %vm870, %v1554, 0.0
        %1574 = vadd.xlane.f32.xlu0 %v1573
        %v1575 = vpop.xlane.xlu0 %1574
        %v1576 = vsel %vm870, %v1556, 0.0
        %1577 = vadd.xlane.f32.xlu0 %v1576
        %v1578 = vpop.xlane.xlu0 %1577
        %v1579 = vsel %vm870, %v1558, 0.0
        %1580 = vadd.xlane.f32.xlu0 %v1579
        %v1581 = vpop.xlane.xlu0 %1580
        %v1582 = vsel %vm870, %v1560, 0.0
        %1583 = vadd.xlane.f32.xlu0 %v1582
        %v1584 = vpop.xlane.xlu0 %1583
        %v1585 = vrcp.pop %v1563
        %v1586 = vrcp.pop %v1566
        %v1587 = vrcp.pop %v1569
        %v1588 = vrcp.pop %v1572
        %v1589 = vrcp.pop %v1575
        %v1590 = vrcp.pop %v1578
        %v1591 = vrcp.pop %v1581
        %v1592 = vrcp.pop %v1584
        %v1593 = vmul.f32 %v1546, %v1585
        %v1594 = vmul.f32 %v1548, %v1586
        %v1595 = vmul.f32 %v1550, %v1587
        %v1596 = vmul.f32 %v1552, %v1588
        %v1597 = vmul.f32 %v1554, %v1589
        %v1598 = vmul.f32 %v1556, %v1590
        %v1599 = vmul.f32 %v1558, %v1591
        %v1600 = vmul.f32 %v1560, %v1592
        %v1601 = vpack.c.bf16 %v1594, %v1593
        %v1602 = vpack.c.bf16 %v1596, %v1595
        %v1603 = vpack.c.bf16 %v1598, %v1597
        %v1604 = vpack.c.bf16 %v1600, %v1599
        %1605 = vrot.lane.b32.xlu0 %v800, 40
        %v1606 = vpop.permute.xlu0 %1605
        %1607 = vrot.lane.b32.xlu0 %v801, 40
        %v1608 = vpop.permute.xlu0 %1607
        %1609 = vrot.lane.b32.xlu0 %v802, 40
        %v1610 = vpop.permute.xlu0 %1609
        %1611 = vrot.lane.b32.xlu0 %v803, 40
        %v1612 = vpop.permute.xlu0 %1611
        %v1618 = vsel %vm870, %v1601, 0
        %v1621 = vsel %vm870, %v1602, 0
        %v1624 = vsel %vm870, %v1603, 0
        %v1627 = vsel %vm870, %v1604, 0
        %1629 = vmatpush.bf16.msra.mxu0 0
        %1630 = vmatpush.bf16.msra.mxu0 0
        %1631 = vmatpush.bf16.msra.mxu0 0
        %1632 = vmatpush.bf16.msra.mxu0 0
        %1633 = vmatpush.bf16.msra.mxu0 %v1612
        %1634 = vmatpush.bf16.msra.mxu0 %v1610
        %1635 = vmatpush.bf16.msra.mxu0 %v1608
        %1636 = vmatpush.bf16.msra.mxu0 %v1606
        %1637 = vmatmul.bf16.gmra.mxu0 %v1618
        %v1638 = vpop.f32.mrf.mxu0
        %v1639 = vadd.f32 0.0, %v1638
        %v1640 = vpop.f32.mrf.mxu0
        %v1641 = vadd.f32 0.0, %v1640
        %1642 = vmatmul.bf16.gmra.mxu0 %v1621
        %v1643 = vpop.f32.mrf.mxu0
        %v1644 = vadd.f32 0.0, %v1643
        %v1645 = vpop.f32.mrf.mxu0
        %v1646 = vadd.f32 0.0, %v1645
        %1647 = vmatmul.bf16.gmra.mxu0 %v1624
        %v1648 = vpop.f32.mrf.mxu0
        %v1649 = vadd.f32 0.0, %v1648
        %v1650 = vpop.f32.mrf.mxu0
        %v1651 = vadd.f32 0.0, %v1650
        %1652 = vmatmul.bf16.gmra.mxu0 %v1627
        %v1653 = vpop.f32.mrf.mxu0
        %v1654 = vadd.f32 0.0, %v1653
        %v1655 = vpop.f32.mrf.mxu0
        %v1656 = vadd.f32 0.0, %v1655
        %1657 = vdwg.mxu0
        %1666 = vrot.lane.b32.xlu0 %v1211, 8
        %v1667 = vpop.permute.xlu0 %1666
        %1668 = vrot.lane.b32.xlu0 %v1213, 8
        %v1669 = vpop.permute.xlu0 %1668
        %1670 = vrot.lane.b32.xlu0 %v1216, 8
        %v1671 = vpop.permute.xlu0 %1670
        %1672 = vrot.lane.b32.xlu0 %v1218, 8
        %v1673 = vpop.permute.xlu0 %1672
        %1674 = vrot.lane.b32.xlu0 %v1221, 8
        %v1675 = vpop.permute.xlu0 %1674
        %1676 = vrot.lane.b32.xlu0 %v1223, 8
        %v1677 = vpop.permute.xlu0 %1676
        %1678 = vrot.lane.b32.xlu0 %v1226, 8
        %v1679 = vpop.permute.xlu0 %1678
        %1680 = vrot.lane.b32.xlu0 %v1228, 8
        %v1681 = vpop.permute.xlu0 %1680
        %1698 = vrot.lane.b32.xlu0 %v1425, 16
        %v1699 = vpop.permute.xlu0 %1698
        %1700 = vrot.lane.b32.xlu0 %v1427, 16
        %v1701 = vpop.permute.xlu0 %1700
        %1702 = vrot.lane.b32.xlu0 %v1430, 16
        %v1703 = vpop.permute.xlu0 %1702
        %1704 = vrot.lane.b32.xlu0 %v1432, 16
        %v1705 = vpop.permute.xlu0 %1704
        %1706 = vrot.lane.b32.xlu0 %v1435, 16
        %v1707 = vpop.permute.xlu0 %1706
        %1708 = vrot.lane.b32.xlu0 %v1437, 16
        %v1709 = vpop.permute.xlu0 %1708
        %1710 = vrot.lane.b32.xlu0 %v1440, 16
        %v1711 = vpop.permute.xlu0 %1710
        %1712 = vrot.lane.b32.xlu0 %v1442, 16
        %v1713 = vpop.permute.xlu0 %1712
        %1730 = vrot.lane.b32.xlu0 %v1639, 24
        %v1731 = vpop.permute.xlu0 %1730
        %1732 = vrot.lane.b32.xlu0 %v1641, 24
        %v1733 = vpop.permute.xlu0 %1732
        %1734 = vrot.lane.b32.xlu0 %v1644, 24
        %v1735 = vpop.permute.xlu0 %1734
        %1736 = vrot.lane.b32.xlu0 %v1646, 24
        %v1737 = vpop.permute.xlu0 %1736
        %1738 = vrot.lane.b32.xlu0 %v1649, 24
        %v1739 = vpop.permute.xlu0 %1738
        %1740 = vrot.lane.b32.xlu0 %v1651, 24
        %v1741 = vpop.permute.xlu0 %1740
        %1742 = vrot.lane.b32.xlu0 %v1654, 24
        %v1743 = vpop.permute.xlu0 %1742
        %1744 = vrot.lane.b32.xlu0 %v1656, 24
        %v1745 = vpop.permute.xlu0 %1744
        %v1754 = vsel %vm816, %v997, %v1667
        %v1755 = vsel %vm816, %v999, %v1669
        %v1756 = vsel %vm816, %v1002, %v1671
        %v1757 = vsel %vm816, %v1004, %v1673
        %v1758 = vsel %vm816, %v1007, %v1675
        %v1759 = vsel %vm816, %v1009, %v1677
        %v1760 = vsel %vm816, %v1012, %v1679
        %v1761 = vsel %vm816, %v1014, %v1681
        %vm1762 = vcmask 130048
        %v1763 = vsel %vm1762, %v1754, %v1699
        %v1764 = vsel %vm1762, %v1755, %v1701
        %v1765 = vsel %vm1762, %v1756, %v1703
        %v1766 = vsel %vm1762, %v1757, %v1705
        %v1767 = vsel %vm1762, %v1758, %v1707
        %v1768 = vsel %vm1762, %v1759, %v1709
        %v1769 = vsel %vm1762, %v1760, %v1711
        %v1770 = vsel %vm1762, %v1761, %v1713
        %vm1771 = vcmask 195584
        %v1772 = vsel %vm1771, %v1763, %v1731
        %v1773 = vsel %vm1771, %v1764, %v1733
        %v1774 = vsel %vm1771, %v1765, %v1735
        %v1775 = vsel %vm1771, %v1766, %v1737
        %v1776 = vsel %vm1771, %v1767, %v1739
        %v1777 = vsel %vm1771, %v1768, %v1741
        %v1778 = vsel %vm1771, %v1769, %v1743
        %v1779 = vsel %vm1771, %v1770, %v1745
        %v1780 = vpack.c.bf16 %v783, %v781
        %v1781 = vpack.c.bf16 %v788, %v786
        %v1782 = vpack.c.bf16 %v793, %v791
        %v1783 = vpack.c.bf16 %v798, %v796
        %1788 = vrot.lane.b32.xlu0 %v1780, 96
        %v1789 = vpop.permute.xlu0 %1788
        %1790 = vrot.lane.b32.xlu0 %v1781, 96
        %v1791 = vpop.permute.xlu0 %1790
        %1792 = vrot.lane.b32.xlu0 %v1782, 96
        %v1793 = vpop.permute.xlu0 %1792
        %1794 = vrot.lane.b32.xlu0 %v1783, 96
        %v1795 = vpop.permute.xlu0 %1794
        %v1797 = vsel %vm816, %v1780, 0
        %v1800 = vsel %vm816, %v1781, 0
        %v1803 = vsel %vm816, %v1782, 0
        %v1806 = vsel %vm816, %v1783, 0
        %v1809 = vsel %vm816, %v1789, 0
        %v1812 = vsel %vm816, %v1791, 0
        %v1815 = vsel %vm816, %v1793, 0
        %v1818 = vsel %vm816, %v1795, 0
        %1820 = vmatpush.bf16.xpose.msra.mxu0 0
        %1821 = vmatpush.bf16.xpose.msra.mxu0 0
        %1822 = vmatpush.bf16.xpose.msra.mxu0 0
        %1823 = vmatpush.bf16.xpose.msra.mxu0 0
        %1824 = vmatpush.bf16.xpose.msra.mxu0 %v1818
        %1825 = vmatpush.bf16.xpose.msra.mxu0 %v1815
        %1826 = vmatpush.bf16.xpose.msra.mxu0 %v1812
        %1827 = vmatpush.bf16.xpose.msra.mxu0 %v1809
        %1828 = vmatmul.bf16.gmra.mxu0 %v1797
        %v1829 = vpop.f32.mrf.mxu0
        %v1830 = vadd.f32 0.0, %v1829
        %v1831 = vpop.f32.mrf.mxu0
        %v1832 = vadd.f32 0.0, %v1831
        %1833 = vmatmul.bf16.gmra.mxu0 %v1800
        %v1834 = vpop.f32.mrf.mxu0
        %v1835 = vadd.f32 0.0, %v1834
        %v1836 = vpop.f32.mrf.mxu0
        %v1837 = vadd.f32 0.0, %v1836
        %1838 = vmatmul.bf16.gmra.mxu0 %v1803
        %v1839 = vpop.f32.mrf.mxu0
        %v1840 = vadd.f32 0.0, %v1839
        %v1841 = vpop.f32.mrf.mxu0
        %v1842 = vadd.f32 0.0, %v1841
        %1843 = vmatmul.bf16.gmra.mxu0 %v1806
        %v1844 = vpop.f32.mrf.mxu0
        %v1845 = vadd.f32 0.0, %v1844
        %v1846 = vpop.f32.mrf.mxu0
        %v1847 = vadd.f32 0.0, %v1846
        %1848 = vdwg.mxu0
        %v1849 = vsel %vm870, %v1830, -inf
        %1850 = vmax.xlane.f32.xlu0 %v1849
        %v1851 = vpop.xlane.xlu0 %1850
        %v1852 = vsel %vm870, %v1832, -inf
        %1853 = vmax.xlane.f32.xlu0 %v1852
        %v1854 = vpop.xlane.xlu0 %1853
        %v1855 = vsel %vm870, %v1835, -inf
        %1856 = vmax.xlane.f32.xlu0 %v1855
        %v1857 = vpop.xlane.xlu0 %1856
        %v1858 = vsel %vm870, %v1837, -inf
        %1859 = vmax.xlane.f32.xlu0 %v1858
        %v1860 = vpop.xlane.xlu0 %1859
        %v1861 = vsel %vm870, %v1840, -inf
        %1862 = vmax.xlane.f32.xlu0 %v1861
        %v1863 = vpop.xlane.xlu0 %1862
        %v1864 = vsel %vm870, %v1842, -inf
        %1865 = vmax.xlane.f32.xlu0 %v1864
        %v1866 = vpop.xlane.xlu0 %1865
        %v1867 = vsel %vm870, %v1845, -inf
        %1868 = vmax.xlane.f32.xlu0 %v1867
        %v1869 = vpop.xlane.xlu0 %1868
        %v1870 = vsel %vm870, %v1847, -inf
        %1871 = vmax.xlane.f32.xlu0 %v1870
        %v1872 = vpop.xlane.xlu0 %1871
        %v1873 = vsub.f32 %v1830, %v1851
        %v1874 = vsub.f32 %v1832, %v1854
        %v1875 = vsub.f32 %v1835, %v1857
        %v1876 = vsub.f32 %v1837, %v1860
        %v1877 = vsub.f32 %v1840, %v1863
        %v1878 = vsub.f32 %v1842, %v1866
        %v1879 = vsub.f32 %v1845, %v1869
        %v1880 = vsub.f32 %v1847, %v1872
        %v1881 = vmul.f32 %v1873, 1.442695
        %v1882 = vpow.pop %v1881
        %v1883 = vmul.f32 %v1874, 1.442695
        %v1884 = vpow.pop %v1883
        %v1885 = vmul.f32 %v1875, 1.442695
        %v1886 = vpow.pop %v1885
        %v1887 = vmul.f32 %v1876, 1.442695
        %v1888 = vpow.pop %v1887
        %v1889 = vmul.f32 %v1877, 1.442695
        %v1890 = vpow.pop %v1889
        %v1891 = vmul.f32 %v1878, 1.442695
        %v1892 = vpow.pop %v1891
        %v1893 = vmul.f32 %v1879, 1.442695
        %v1894 = vpow.pop %v1893
        %v1895 = vmul.f32 %v1880, 1.442695
        %v1896 = vpow.pop %v1895
        %v1897 = vsel %vm870, %v1882, 0.0
        %1898 = vadd.xlane.f32.xlu0 %v1897
        %v1899 = vpop.xlane.xlu0 %1898
        %v1900 = vsel %vm870, %v1884, 0.0
        %1901 = vadd.xlane.f32.xlu0 %v1900
        %v1902 = vpop.xlane.xlu0 %1901
        %v1903 = vsel %vm870, %v1886, 0.0
        %1904 = vadd.xlane.f32.xlu0 %v1903
        %v1905 = vpop.xlane.xlu0 %1904
        %v1906 = vsel %vm870, %v1888, 0.0
        %1907 = vadd.xlane.f32.xlu0 %v1906
        %v1908 = vpop.xlane.xlu0 %1907
        %v1909 = vsel %vm870, %v1890, 0.0
        %1910 = vadd.xlane.f32.xlu0 %v1909
        %v1911 = vpop.xlane.xlu0 %1910
        %v1912 = vsel %vm870, %v1892, 0.0
        %1913 = vadd.xlane.f32.xlu0 %v1912
        %v1914 = vpop.xlane.xlu0 %1913
        %v1915 = vsel %vm870, %v1894, 0.0
        %1916 = vadd.xlane.f32.xlu0 %v1915
        %v1917 = vpop.xlane.xlu0 %1916
        %v1918 = vsel %vm870, %v1896, 0.0
        %1919 = vadd.xlane.f32.xlu0 %v1918
        %v1920 = vpop.xlane.xlu0 %1919
        %v1921 = vrcp.pop %v1899
        %v1922 = vrcp.pop %v1902
        %v1923 = vrcp.pop %v1905
        %v1924 = vrcp.pop %v1908
        %v1925 = vrcp.pop %v1911
        %v1926 = vrcp.pop %v1914
        %v1927 = vrcp.pop %v1917
        %v1928 = vrcp.pop %v1920
        %v1929 = vmul.f32 %v1882, %v1921
        %v1930 = vmul.f32 %v1884, %v1922
        %v1931 = vmul.f32 %v1886, %v1923
        %v1932 = vmul.f32 %v1888, %v1924
        %v1933 = vmul.f32 %v1890, %v1925
        %v1934 = vmul.f32 %v1892, %v1926
        %v1935 = vmul.f32 %v1894, %v1927
        %v1936 = vmul.f32 %v1896, %v1928
        %v1937 = vpack.c.bf16 %v1930, %v1929
        %v1938 = vpack.c.bf16 %v1932, %v1931
        %v1939 = vpack.c.bf16 %v1934, %v1933
        %v1940 = vpack.c.bf16 %v1936, %v1935
        %1941 = vrot.lane.b32.xlu0 %v1780, 64
        %v1942 = vpop.permute.xlu0 %1941
        %1943 = vrot.lane.b32.xlu0 %v1781, 64
        %v1944 = vpop.permute.xlu0 %1943
        %1945 = vrot.lane.b32.xlu0 %v1782, 64
        %v1946 = vpop.permute.xlu0 %1945
        %1947 = vrot.lane.b32.xlu0 %v1783, 64
        %v1948 = vpop.permute.xlu0 %1947
        %v1954 = vsel %vm870, %v1937, 0
        %v1957 = vsel %vm870, %v1938, 0
        %v1960 = vsel %vm870, %v1939, 0
        %v1963 = vsel %vm870, %v1940, 0
        %1965 = vmatpush.bf16.msra.mxu0 0
        %1966 = vmatpush.bf16.msra.mxu0 0
        %1967 = vmatpush.bf16.msra.mxu0 0
        %1968 = vmatpush.bf16.msra.mxu0 0
        %1969 = vmatpush.bf16.msra.mxu0 %v1948
        %1970 = vmatpush.bf16.msra.mxu0 %v1946
        %1971 = vmatpush.bf16.msra.mxu0 %v1944
        %1972 = vmatpush.bf16.msra.mxu0 %v1942
        %1973 = vmatmul.bf16.gmra.mxu0 %v1954
        %v1974 = vpop.f32.mrf.mxu0
        %v1975 = vadd.f32 0.0, %v1974
        %v1976 = vpop.f32.mrf.mxu0
        %v1977 = vadd.f32 0.0, %v1976
        %1978 = vmatmul.bf16.gmra.mxu0 %v1957
        %v1979 = vpop.f32.mrf.mxu0
        %v1980 = vadd.f32 0.0, %v1979
        %v1981 = vpop.f32.mrf.mxu0
        %v1982 = vadd.f32 0.0, %v1981
        %1983 = vmatmul.bf16.gmra.mxu0 %v1960
        %v1984 = vpop.f32.mrf.mxu0
        %v1985 = vadd.f32 0.0, %v1984
        %v1986 = vpop.f32.mrf.mxu0
        %v1987 = vadd.f32 0.0, %v1986
        %1988 = vmatmul.bf16.gmra.mxu0 %v1963
        %v1989 = vpop.f32.mrf.mxu0
        %v1990 = vadd.f32 0.0, %v1989
        %v1991 = vpop.f32.mrf.mxu0
        %v1992 = vadd.f32 0.0, %v1991
        %1993 = vdwg.mxu0
        %1994 = vrot.lane.b32.xlu0 %v1780, 120
        %v1995 = vpop.permute.xlu0 %1994
        %1996 = vrot.lane.b32.xlu0 %v1781, 120
        %v1997 = vpop.permute.xlu0 %1996
        %1998 = vrot.lane.b32.xlu0 %v1782, 120
        %v1999 = vpop.permute.xlu0 %1998
        %2000 = vrot.lane.b32.xlu0 %v1783, 120
        %v2001 = vpop.permute.xlu0 %2000
        %2002 = vrot.lane.b32.xlu0 %v1780, 88
        %v2003 = vpop.permute.xlu0 %2002
        %2004 = vrot.lane.b32.xlu0 %v1781, 88
        %v2005 = vpop.permute.xlu0 %2004
        %2006 = vrot.lane.b32.xlu0 %v1782, 88
        %v2007 = vpop.permute.xlu0 %2006
        %2008 = vrot.lane.b32.xlu0 %v1783, 88
        %v2009 = vpop.permute.xlu0 %2008
        %v2011 = vsel %vm816, %v1995, 0
        %v2014 = vsel %vm816, %v1997, 0
        %v2017 = vsel %vm816, %v1999, 0
        %v2020 = vsel %vm816, %v2001, 0
        %v2023 = vsel %vm816, %v2003, 0
        %v2026 = vsel %vm816, %v2005, 0
        %v2029 = vsel %vm816, %v2007, 0
        %v2032 = vsel %vm816, %v2009, 0
        %2034 = vmatpush.bf16.xpose.msra.mxu0 0
        %2035 = vmatpush.bf16.xpose.msra.mxu0 0
        %2036 = vmatpush.bf16.xpose.msra.mxu0 0
        %2037 = vmatpush.bf16.xpose.msra.mxu0 0
        %2038 = vmatpush.bf16.xpose.msra.mxu0 %v2032
        %2039 = vmatpush.bf16.xpose.msra.mxu0 %v2029
        %2040 = vmatpush.bf16.xpose.msra.mxu0 %v2026
        %2041 = vmatpush.bf16.xpose.msra.mxu0 %v2023
        %2042 = vmatmul.bf16.gmra.mxu0 %v2011
        %v2043 = vpop.f32.mrf.mxu0
        %v2044 = vadd.f32 0.0, %v2043
        %v2045 = vpop.f32.mrf.mxu0
        %v2046 = vadd.f32 0.0, %v2045
        %2047 = vmatmul.bf16.gmra.mxu0 %v2014
        %v2048 = vpop.f32.mrf.mxu0
        %v2049 = vadd.f32 0.0, %v2048
        %v2050 = vpop.f32.mrf.mxu0
        %v2051 = vadd.f32 0.0, %v2050
        %2052 = vmatmul.bf16.gmra.mxu0 %v2017
        %v2053 = vpop.f32.mrf.mxu0
        %v2054 = vadd.f32 0.0, %v2053
        %v2055 = vpop.f32.mrf.mxu0
        %v2056 = vadd.f32 0.0, %v2055
        %2057 = vmatmul.bf16.gmra.mxu0 %v2020
        %v2058 = vpop.f32.mrf.mxu0
        %v2059 = vadd.f32 0.0, %v2058
        %v2060 = vpop.f32.mrf.mxu0
        %v2061 = vadd.f32 0.0, %v2060
        %2062 = vdwg.mxu0
        %v2063 = vsel %vm870, %v2044, -inf
        %2064 = vmax.xlane.f32.xlu0 %v2063
        %v2065 = vpop.xlane.xlu0 %2064
        %v2066 = vsel %vm870, %v2046, -inf
        %2067 = vmax.xlane.f32.xlu0 %v2066
        %v2068 = vpop.xlane.xlu0 %2067
        %v2069 = vsel %vm870, %v2049, -inf
        %2070 = vmax.xlane.f32.xlu0 %v2069
        %v2071 = vpop.xlane.xlu0 %2070
        %v2072 = vsel %vm870, %v2051, -inf
        %2073 = vmax.xlane.f32.xlu0 %v2072
        %v2074 = vpop.xlane.xlu0 %2073
        %v2075 = vsel %vm870, %v2054, -inf
        %2076 = vmax.xlane.f32.xlu0 %v2075
        %v2077 = vpop.xlane.xlu0 %2076
        %v2078 = vsel %vm870, %v2056, -inf
        %2079 = vmax.xlane.f32.xlu0 %v2078
        %v2080 = vpop.xlane.xlu0 %2079
        %v2081 = vsel %vm870, %v2059, -inf
        %2082 = vmax.xlane.f32.xlu0 %v2081
        %v2083 = vpop.xlane.xlu0 %2082
        %v2084 = vsel %vm870, %v2061, -inf
        %2085 = vmax.xlane.f32.xlu0 %v2084
        %v2086 = vpop.xlane.xlu0 %2085
        %v2087 = vsub.f32 %v2044, %v2065
        %v2088 = vsub.f32 %v2046, %v2068
        %v2089 = vsub.f32 %v2049, %v2071
        %v2090 = vsub.f32 %v2051, %v2074
        %v2091 = vsub.f32 %v2054, %v2077
        %v2092 = vsub.f32 %v2056, %v2080
        %v2093 = vsub.f32 %v2059, %v2083
        %v2094 = vsub.f32 %v2061, %v2086
        %v2095 = vmul.f32 %v2087, 1.442695
        %v2096 = vpow.pop %v2095
        %v2097 = vmul.f32 %v2088, 1.442695
        %v2098 = vpow.pop %v2097
        %v2099 = vmul.f32 %v2089, 1.442695
        %v2100 = vpow.pop %v2099
        %v2101 = vmul.f32 %v2090, 1.442695
        %v2102 = vpow.pop %v2101
        %v2103 = vmul.f32 %v2091, 1.442695
        %v2104 = vpow.pop %v2103
        %v2105 = vmul.f32 %v2092, 1.442695
        %v2106 = vpow.pop %v2105
        %v2107 = vmul.f32 %v2093, 1.442695
        %v2108 = vpow.pop %v2107
        %v2109 = vmul.f32 %v2094, 1.442695
        %v2110 = vpow.pop %v2109
        %v2111 = vsel %vm870, %v2096, 0.0
        %2112 = vadd.xlane.f32.xlu0 %v2111
        %v2113 = vpop.xlane.xlu0 %2112
        %v2114 = vsel %vm870, %v2098, 0.0
        %2115 = vadd.xlane.f32.xlu0 %v2114
        %v2116 = vpop.xlane.xlu0 %2115
        %v2117 = vsel %vm870, %v2100, 0.0
        %2118 = vadd.xlane.f32.xlu0 %v2117
        %v2119 = vpop.xlane.xlu0 %2118
        %v2120 = vsel %vm870, %v2102, 0.0
        %2121 = vadd.xlane.f32.xlu0 %v2120
        %v2122 = vpop.xlane.xlu0 %2121
        %v2123 = vsel %vm870, %v2104, 0.0
        %2124 = vadd.xlane.f32.xlu0 %v2123
        %v2125 = vpop.xlane.xlu0 %2124
        %v2126 = vsel %vm870, %v2106, 0.0
        %2127 = vadd.xlane.f32.xlu0 %v2126
        %v2128 = vpop.xlane.xlu0 %2127
        %v2129 = vsel %vm870, %v2108, 0.0
        %2130 = vadd.xlane.f32.xlu0 %v2129
        %v2131 = vpop.xlane.xlu0 %2130
        %v2132 = vsel %vm870, %v2110, 0.0
        %2133 = vadd.xlane.f32.xlu0 %v2132
        %v2134 = vpop.xlane.xlu0 %2133
        %v2135 = vrcp.pop %v2113
        %v2136 = vrcp.pop %v2116
        %v2137 = vrcp.pop %v2119
        %v2138 = vrcp.pop %v2122
        %v2139 = vrcp.pop %v2125
        %v2140 = vrcp.pop %v2128
        %v2141 = vrcp.pop %v2131
        %v2142 = vrcp.pop %v2134
        %v2143 = vmul.f32 %v2096, %v2135
        %v2144 = vmul.f32 %v2098, %v2136
        %v2145 = vmul.f32 %v2100, %v2137
        %v2146 = vmul.f32 %v2102, %v2138
        %v2147 = vmul.f32 %v2104, %v2139
        %v2148 = vmul.f32 %v2106, %v2140
        %v2149 = vmul.f32 %v2108, %v2141
        %v2150 = vmul.f32 %v2110, %v2142
        %v2151 = vpack.c.bf16 %v2144, %v2143
        %v2152 = vpack.c.bf16 %v2146, %v2145
        %v2153 = vpack.c.bf16 %v2148, %v2147
        %v2154 = vpack.c.bf16 %v2150, %v2149
        %2155 = vrot.lane.b32.xlu0 %v1780, 56
        %v2156 = vpop.permute.xlu0 %2155
        %2157 = vrot.lane.b32.xlu0 %v1781, 56
        %v2158 = vpop.permute.xlu0 %2157
        %2159 = vrot.lane.b32.xlu0 %v1782, 56
        %v2160 = vpop.permute.xlu0 %2159
        %2161 = vrot.lane.b32.xlu0 %v1783, 56
        %v2162 = vpop.permute.xlu0 %2161
        %v2168 = vsel %vm870, %v2151, 0
        %v2171 = vsel %vm870, %v2152, 0
        %v2174 = vsel %vm870, %v2153, 0
        %v2177 = vsel %vm870, %v2154, 0
        %2179 = vmatpush.bf16.msra.mxu0 0
        %2180 = vmatpush.bf16.msra.mxu0 0
        %2181 = vmatpush.bf16.msra.mxu0 0
        %2182 = vmatpush.bf16.msra.mxu0 0
        %2183 = vmatpush.bf16.msra.mxu0 %v2162
        %2184 = vmatpush.bf16.msra.mxu0 %v2160
        %2185 = vmatpush.bf16.msra.mxu0 %v2158
        %2186 = vmatpush.bf16.msra.mxu0 %v2156
        %2187 = vmatmul.bf16.gmra.mxu0 %v2168
        %v2188 = vpop.f32.mrf.mxu0
        %v2189 = vadd.f32 0.0, %v2188
        %v2190 = vpop.f32.mrf.mxu0
        %v2191 = vadd.f32 0.0, %v2190
        %2192 = vmatmul.bf16.gmra.mxu0 %v2171
        %v2193 = vpop.f32.mrf.mxu0
        %v2194 = vadd.f32 0.0, %v2193
        %v2195 = vpop.f32.mrf.mxu0
        %v2196 = vadd.f32 0.0, %v2195
        %2197 = vmatmul.bf16.gmra.mxu0 %v2174
        %v2198 = vpop.f32.mrf.mxu0
        %v2199 = vadd.f32 0.0, %v2198
        %v2200 = vpop.f32.mrf.mxu0
        %v2201 = vadd.f32 0.0, %v2200
        %2202 = vmatmul.bf16.gmra.mxu0 %v2177
        %v2203 = vpop.f32.mrf.mxu0
        %v2204 = vadd.f32 0.0, %v2203
        %v2205 = vpop.f32.mrf.mxu0
        %v2206 = vadd.f32 0.0, %v2205
        %2207 = vdwg.mxu0
        %2208 = vrot.lane.b32.xlu0 %v1780, 112
        %v2209 = vpop.permute.xlu0 %2208
        %2210 = vrot.lane.b32.xlu0 %v1781, 112
        %v2211 = vpop.permute.xlu0 %2210
        %2212 = vrot.lane.b32.xlu0 %v1782, 112
        %v2213 = vpop.permute.xlu0 %2212
        %2214 = vrot.lane.b32.xlu0 %v1783, 112
        %v2215 = vpop.permute.xlu0 %2214
        %2216 = vrot.lane.b32.xlu0 %v1780, 80
        %v2217 = vpop.permute.xlu0 %2216
        %2218 = vrot.lane.b32.xlu0 %v1781, 80
        %v2219 = vpop.permute.xlu0 %2218
        %2220 = vrot.lane.b32.xlu0 %v1782, 80
        %v2221 = vpop.permute.xlu0 %2220
        %2222 = vrot.lane.b32.xlu0 %v1783, 80
        %v2223 = vpop.permute.xlu0 %2222
        %v2225 = vsel %vm816, %v2209, 0
        %v2228 = vsel %vm816, %v2211, 0
        %v2231 = vsel %vm816, %v2213, 0
        %v2234 = vsel %vm816, %v2215, 0
        %v2237 = vsel %vm816, %v2217, 0
        %v2240 = vsel %vm816, %v2219, 0
        %v2243 = vsel %vm816, %v2221, 0
        %v2246 = vsel %vm816, %v2223, 0
        %2248 = vmatpush.bf16.xpose.msra.mxu0 0
        %2249 = vmatpush.bf16.xpose.msra.mxu0 0
        %2250 = vmatpush.bf16.xpose.msra.mxu0 0
        %2251 = vmatpush.bf16.xpose.msra.mxu0 0
        %2252 = vmatpush.bf16.xpose.msra.mxu0 %v2246
        %2253 = vmatpush.bf16.xpose.msra.mxu0 %v2243
        %2254 = vmatpush.bf16.xpose.msra.mxu0 %v2240
        %2255 = vmatpush.bf16.xpose.msra.mxu0 %v2237
        %2256 = vmatmul.bf16.gmra.mxu0 %v2225
        %v2257 = vpop.f32.mrf.mxu0
        %v2258 = vadd.f32 0.0, %v2257
        %v2259 = vpop.f32.mrf.mxu0
        %v2260 = vadd.f32 0.0, %v2259
        %2261 = vmatmul.bf16.gmra.mxu0 %v2228
        %v2262 = vpop.f32.mrf.mxu0
        %v2263 = vadd.f32 0.0, %v2262
        %v2264 = vpop.f32.mrf.mxu0
        %v2265 = vadd.f32 0.0, %v2264
        %2266 = vmatmul.bf16.gmra.mxu0 %v2231
        %v2267 = vpop.f32.mrf.mxu0
        %v2268 = vadd.f32 0.0, %v2267
        %v2269 = vpop.f32.mrf.mxu0
        %v2270 = vadd.f32 0.0, %v2269
        %2271 = vmatmul.bf16.gmra.mxu0 %v2234
        %v2272 = vpop.f32.mrf.mxu0
        %v2273 = vadd.f32 0.0, %v2272
        %v2274 = vpop.f32.mrf.mxu0
        %v2275 = vadd.f32 0.0, %v2274
        %2276 = vdwg.mxu0
        %v2277 = vsel %vm870, %v2258, -inf
        %2278 = vmax.xlane.f32.xlu0 %v2277
        %v2279 = vpop.xlane.xlu0 %2278
        %v2280 = vsel %vm870, %v2260, -inf
        %2281 = vmax.xlane.f32.xlu0 %v2280
        %v2282 = vpop.xlane.xlu0 %2281
        %v2283 = vsel %vm870, %v2263, -inf
        %2284 = vmax.xlane.f32.xlu0 %v2283
        %v2285 = vpop.xlane.xlu0 %2284
        %v2286 = vsel %vm870, %v2265, -inf
        %2287 = vmax.xlane.f32.xlu0 %v2286
        %v2288 = vpop.xlane.xlu0 %2287
        %v2289 = vsel %vm870, %v2268, -inf
        %2290 = vmax.xlane.f32.xlu0 %v2289
        %v2291 = vpop.xlane.xlu0 %2290
        %v2292 = vsel %vm870, %v2270, -inf
        %2293 = vmax.xlane.f32.xlu0 %v2292
        %v2294 = vpop.xlane.xlu0 %2293
        %v2295 = vsel %vm870, %v2273, -inf
        %2296 = vmax.xlane.f32.xlu0 %v2295
        %v2297 = vpop.xlane.xlu0 %2296
        %v2298 = vsel %vm870, %v2275, -inf
        %2299 = vmax.xlane.f32.xlu0 %v2298
        %v2300 = vpop.xlane.xlu0 %2299
        %v2301 = vsub.f32 %v2258, %v2279
        %v2302 = vsub.f32 %v2260, %v2282
        %v2303 = vsub.f32 %v2263, %v2285
        %v2304 = vsub.f32 %v2265, %v2288
        %v2305 = vsub.f32 %v2268, %v2291
        %v2306 = vsub.f32 %v2270, %v2294
        %v2307 = vsub.f32 %v2273, %v2297
        %v2308 = vsub.f32 %v2275, %v2300
        %v2309 = vmul.f32 %v2301, 1.442695
        %v2310 = vpow.pop %v2309
        %v2311 = vmul.f32 %v2302, 1.442695
        %v2312 = vpow.pop %v2311
        %v2313 = vmul.f32 %v2303, 1.442695
        %v2314 = vpow.pop %v2313
        %v2315 = vmul.f32 %v2304, 1.442695
        %v2316 = vpow.pop %v2315
        %v2317 = vmul.f32 %v2305, 1.442695
        %v2318 = vpow.pop %v2317
        %v2319 = vmul.f32 %v2306, 1.442695
        %v2320 = vpow.pop %v2319
        %v2321 = vmul.f32 %v2307, 1.442695
        %v2322 = vpow.pop %v2321
        %v2323 = vmul.f32 %v2308, 1.442695
        %v2324 = vpow.pop %v2323
        %v2325 = vsel %vm870, %v2310, 0.0
        %2326 = vadd.xlane.f32.xlu0 %v2325
        %v2327 = vpop.xlane.xlu0 %2326
        %v2328 = vsel %vm870, %v2312, 0.0
        %2329 = vadd.xlane.f32.xlu0 %v2328
        %v2330 = vpop.xlane.xlu0 %2329
        %v2331 = vsel %vm870, %v2314, 0.0
        %2332 = vadd.xlane.f32.xlu0 %v2331
        %v2333 = vpop.xlane.xlu0 %2332
        %v2334 = vsel %vm870, %v2316, 0.0
        %2335 = vadd.xlane.f32.xlu0 %v2334
        %v2336 = vpop.xlane.xlu0 %2335
        %v2337 = vsel %vm870, %v2318, 0.0
        %2338 = vadd.xlane.f32.xlu0 %v2337
        %v2339 = vpop.xlane.xlu0 %2338
        %v2340 = vsel %vm870, %v2320, 0.0
        %2341 = vadd.xlane.f32.xlu0 %v2340
        %v2342 = vpop.xlane.xlu0 %2341
        %v2343 = vsel %vm870, %v2322, 0.0
        %2344 = vadd.xlane.f32.xlu0 %v2343
        %v2345 = vpop.xlane.xlu0 %2344
        %v2346 = vsel %vm870, %v2324, 0.0
        %2347 = vadd.xlane.f32.xlu0 %v2346
        %v2348 = vpop.xlane.xlu0 %2347
        %v2349 = vrcp.pop %v2327
        %v2350 = vrcp.pop %v2330
        %v2351 = vrcp.pop %v2333
        %v2352 = vrcp.pop %v2336
        %v2353 = vrcp.pop %v2339
        %v2354 = vrcp.pop %v2342
        %v2355 = vrcp.pop %v2345
        %v2356 = vrcp.pop %v2348
        %v2357 = vmul.f32 %v2310, %v2349
        %v2358 = vmul.f32 %v2312, %v2350
        %v2359 = vmul.f32 %v2314, %v2351
        %v2360 = vmul.f32 %v2316, %v2352
        %v2361 = vmul.f32 %v2318, %v2353
        %v2362 = vmul.f32 %v2320, %v2354
        %v2363 = vmul.f32 %v2322, %v2355
        %v2364 = vmul.f32 %v2324, %v2356
        %v2365 = vpack.c.bf16 %v2358, %v2357
        %v2366 = vpack.c.bf16 %v2360, %v2359
        %v2367 = vpack.c.bf16 %v2362, %v2361
        %v2368 = vpack.c.bf16 %v2364, %v2363
        %2369 = vrot.lane.b32.xlu0 %v1780, 48
        %v2370 = vpop.permute.xlu0 %2369
        %2371 = vrot.lane.b32.xlu0 %v1781, 48
        %v2372 = vpop.permute.xlu0 %2371
        %2373 = vrot.lane.b32.xlu0 %v1782, 48
        %v2374 = vpop.permute.xlu0 %2373
        %2375 = vrot.lane.b32.xlu0 %v1783, 48
        %v2376 = vpop.permute.xlu0 %2375
        %v2382 = vsel %vm870, %v2365, 0
        %v2385 = vsel %vm870, %v2366, 0
        %v2388 = vsel %vm870, %v2367, 0
        %v2391 = vsel %vm870, %v2368, 0
        %2393 = vmatpush.bf16.msra.mxu0 0
        %2394 = vmatpush.bf16.msra.mxu0 0
        %2395 = vmatpush.bf16.msra.mxu0 0
        %2396 = vmatpush.bf16.msra.mxu0 0
        %2397 = vmatpush.bf16.msra.mxu0 %v2376
        %2398 = vmatpush.bf16.msra.mxu0 %v2374
        %2399 = vmatpush.bf16.msra.mxu0 %v2372
        %2400 = vmatpush.bf16.msra.mxu0 %v2370
        %2401 = vmatmul.bf16.gmra.mxu0 %v2382
        %v2402 = vpop.f32.mrf.mxu0
        %v2403 = vadd.f32 0.0, %v2402
        %v2404 = vpop.f32.mrf.mxu0
        %v2405 = vadd.f32 0.0, %v2404
        %2406 = vmatmul.bf16.gmra.mxu0 %v2385
        %v2407 = vpop.f32.mrf.mxu0
        %v2408 = vadd.f32 0.0, %v2407
        %v2409 = vpop.f32.mrf.mxu0
        %v2410 = vadd.f32 0.0, %v2409
        %2411 = vmatmul.bf16.gmra.mxu0 %v2388
        %v2412 = vpop.f32.mrf.mxu0
        %v2413 = vadd.f32 0.0, %v2412
        %v2414 = vpop.f32.mrf.mxu0
        %v2415 = vadd.f32 0.0, %v2414
        %2416 = vmatmul.bf16.gmra.mxu0 %v2391
        %v2417 = vpop.f32.mrf.mxu0
        %v2418 = vadd.f32 0.0, %v2417
        %v2419 = vpop.f32.mrf.mxu0
        %v2420 = vadd.f32 0.0, %v2419
        %2421 = vdwg.mxu0
        %2422 = vrot.lane.b32.xlu0 %v1780, 104
        %v2423 = vpop.permute.xlu0 %2422
        %2424 = vrot.lane.b32.xlu0 %v1781, 104
        %v2425 = vpop.permute.xlu0 %2424
        %2426 = vrot.lane.b32.xlu0 %v1782, 104
        %v2427 = vpop.permute.xlu0 %2426
        %2428 = vrot.lane.b32.xlu0 %v1783, 104
        %v2429 = vpop.permute.xlu0 %2428
        %2430 = vrot.lane.b32.xlu0 %v1780, 72
        %v2431 = vpop.permute.xlu0 %2430
        %2432 = vrot.lane.b32.xlu0 %v1781, 72
        %v2433 = vpop.permute.xlu0 %2432
        %2434 = vrot.lane.b32.xlu0 %v1782, 72
        %v2435 = vpop.permute.xlu0 %2434
        %2436 = vrot.lane.b32.xlu0 %v1783, 72
        %v2437 = vpop.permute.xlu0 %2436
        %v2439 = vsel %vm816, %v2423, 0
        %v2442 = vsel %vm816, %v2425, 0
        %v2445 = vsel %vm816, %v2427, 0
        %v2448 = vsel %vm816, %v2429, 0
        %v2451 = vsel %vm816, %v2431, 0
        %v2454 = vsel %vm816, %v2433, 0
        %v2457 = vsel %vm816, %v2435, 0
        %v2460 = vsel %vm816, %v2437, 0
        %2462 = vmatpush.bf16.xpose.msra.mxu0 0
        %2463 = vmatpush.bf16.xpose.msra.mxu0 0
        %2464 = vmatpush.bf16.xpose.msra.mxu0 0
        %2465 = vmatpush.bf16.xpose.msra.mxu0 0
        %2466 = vmatpush.bf16.xpose.msra.mxu0 %v2460
        %2467 = vmatpush.bf16.xpose.msra.mxu0 %v2457
        %2468 = vmatpush.bf16.xpose.msra.mxu0 %v2454
        %2469 = vmatpush.bf16.xpose.msra.mxu0 %v2451
        %2470 = vmatmul.bf16.gmra.mxu0 %v2439
        %v2471 = vpop.f32.mrf.mxu0
        %v2472 = vadd.f32 0.0, %v2471
        %v2473 = vpop.f32.mrf.mxu0
        %v2474 = vadd.f32 0.0, %v2473
        %2475 = vmatmul.bf16.gmra.mxu0 %v2442
        %v2476 = vpop.f32.mrf.mxu0
        %v2477 = vadd.f32 0.0, %v2476
        %v2478 = vpop.f32.mrf.mxu0
        %v2479 = vadd.f32 0.0, %v2478
        %2480 = vmatmul.bf16.gmra.mxu0 %v2445
        %v2481 = vpop.f32.mrf.mxu0
        %v2482 = vadd.f32 0.0, %v2481
        %v2483 = vpop.f32.mrf.mxu0
        %v2484 = vadd.f32 0.0, %v2483
        %2485 = vmatmul.bf16.gmra.mxu0 %v2448
        %v2486 = vpop.f32.mrf.mxu0
        %v2487 = vadd.f32 0.0, %v2486
        %v2488 = vpop.f32.mrf.mxu0
        %v2489 = vadd.f32 0.0, %v2488
        %2490 = vdwg.mxu0
        %v2491 = vsel %vm870, %v2472, -inf
        %2492 = vmax.xlane.f32.xlu0 %v2491
        %v2493 = vpop.xlane.xlu0 %2492
        %v2494 = vsel %vm870, %v2474, -inf
        %2495 = vmax.xlane.f32.xlu0 %v2494
        %v2496 = vpop.xlane.xlu0 %2495
        %v2497 = vsel %vm870, %v2477, -inf
        %2498 = vmax.xlane.f32.xlu0 %v2497
        %v2499 = vpop.xlane.xlu0 %2498
        %v2500 = vsel %vm870, %v2479, -inf
        %2501 = vmax.xlane.f32.xlu0 %v2500
        %v2502 = vpop.xlane.xlu0 %2501
        %v2503 = vsel %vm870, %v2482, -inf
        %2504 = vmax.xlane.f32.xlu0 %v2503
        %v2505 = vpop.xlane.xlu0 %2504
        %v2506 = vsel %vm870, %v2484, -inf
        %2507 = vmax.xlane.f32.xlu0 %v2506
        %v2508 = vpop.xlane.xlu0 %2507
        %v2509 = vsel %vm870, %v2487, -inf
        %2510 = vmax.xlane.f32.xlu0 %v2509
        %v2511 = vpop.xlane.xlu0 %2510
        %v2512 = vsel %vm870, %v2489, -inf
        %2513 = vmax.xlane.f32.xlu0 %v2512
        %v2514 = vpop.xlane.xlu0 %2513
        %v2515 = vsub.f32 %v2472, %v2493
        %v2516 = vsub.f32 %v2474, %v2496
        %v2517 = vsub.f32 %v2477, %v2499
        %v2518 = vsub.f32 %v2479, %v2502
        %v2519 = vsub.f32 %v2482, %v2505
        %v2520 = vsub.f32 %v2484, %v2508
        %v2521 = vsub.f32 %v2487, %v2511
        %v2522 = vsub.f32 %v2489, %v2514
        %v2523 = vmul.f32 %v2515, 1.442695
        %v2524 = vpow.pop %v2523
        %v2525 = vmul.f32 %v2516, 1.442695
        %v2526 = vpow.pop %v2525
        %v2527 = vmul.f32 %v2517, 1.442695
        %v2528 = vpow.pop %v2527
        %v2529 = vmul.f32 %v2518, 1.442695
        %v2530 = vpow.pop %v2529
        %v2531 = vmul.f32 %v2519, 1.442695
        %v2532 = vpow.pop %v2531
        %v2533 = vmul.f32 %v2520, 1.442695
        %v2534 = vpow.pop %v2533
        %v2535 = vmul.f32 %v2521, 1.442695
        %v2536 = vpow.pop %v2535
        %v2537 = vmul.f32 %v2522, 1.442695
        %v2538 = vpow.pop %v2537
        %v2539 = vsel %vm870, %v2524, 0.0
        %2540 = vadd.xlane.f32.xlu0 %v2539
        %v2541 = vpop.xlane.xlu0 %2540
        %v2542 = vsel %vm870, %v2526, 0.0
        %2543 = vadd.xlane.f32.xlu0 %v2542
        %v2544 = vpop.xlane.xlu0 %2543
        %v2545 = vsel %vm870, %v2528, 0.0
        %2546 = vadd.xlane.f32.xlu0 %v2545
        %v2547 = vpop.xlane.xlu0 %2546
        %v2548 = vsel %vm870, %v2530, 0.0
        %2549 = vadd.xlane.f32.xlu0 %v2548
        %v2550 = vpop.xlane.xlu0 %2549
        %v2551 = vsel %vm870, %v2532, 0.0
        %2552 = vadd.xlane.f32.xlu0 %v2551
        %v2553 = vpop.xlane.xlu0 %2552
        %v2554 = vsel %vm870, %v2534, 0.0
        %2555 = vadd.xlane.f32.xlu0 %v2554
        %v2556 = vpop.xlane.xlu0 %2555
        %v2557 = vsel %vm870, %v2536, 0.0
        %2558 = vadd.xlane.f32.xlu0 %v2557
        %v2559 = vpop.xlane.xlu0 %2558
        %v2560 = vsel %vm870, %v2538, 0.0
        %2561 = vadd.xlane.f32.xlu0 %v2560
        %v2562 = vpop.xlane.xlu0 %2561
        %v2563 = vrcp.pop %v2541
        %v2564 = vrcp.pop %v2544
        %v2565 = vrcp.pop %v2547
        %v2566 = vrcp.pop %v2550
        %v2567 = vrcp.pop %v2553
        %v2568 = vrcp.pop %v2556
        %v2569 = vrcp.pop %v2559
        %v2570 = vrcp.pop %v2562
        %v2571 = vmul.f32 %v2524, %v2563
        %v2572 = vmul.f32 %v2526, %v2564
        %v2573 = vmul.f32 %v2528, %v2565
        %v2574 = vmul.f32 %v2530, %v2566
        %v2575 = vmul.f32 %v2532, %v2567
        %v2576 = vmul.f32 %v2534, %v2568
        %v2577 = vmul.f32 %v2536, %v2569
        %v2578 = vmul.f32 %v2538, %v2570
        %v2579 = vpack.c.bf16 %v2572, %v2571
        %v2580 = vpack.c.bf16 %v2574, %v2573
        %v2581 = vpack.c.bf16 %v2576, %v2575
        %v2582 = vpack.c.bf16 %v2578, %v2577
        %2583 = vrot.lane.b32.xlu0 %v1780, 40
        %v2584 = vpop.permute.xlu0 %2583
        %2585 = vrot.lane.b32.xlu0 %v1781, 40
        %v2586 = vpop.permute.xlu0 %2585
        %2587 = vrot.lane.b32.xlu0 %v1782, 40
        %v2588 = vpop.permute.xlu0 %2587
        %2589 = vrot.lane.b32.xlu0 %v1783, 40
        %v2590 = vpop.permute.xlu0 %2589
        %v2596 = vsel %vm870, %v2579, 0
        %v2599 = vsel %vm870, %v2580, 0
        %v2602 = vsel %vm870, %v2581, 0
        %v2605 = vsel %vm870, %v2582, 0
        %2607 = vmatpush.bf16.msra.mxu0 0
        %2608 = vmatpush.bf16.msra.mxu0 0
        %2609 = vmatpush.bf16.msra.mxu0 0
        %2610 = vmatpush.bf16.msra.mxu0 0
        %2611 = vmatpush.bf16.msra.mxu0 %v2590
        %2612 = vmatpush.bf16.msra.mxu0 %v2588
        %2613 = vmatpush.bf16.msra.mxu0 %v2586
        %2614 = vmatpush.bf16.msra.mxu0 %v2584
        %2615 = vmatmul.bf16.gmra.mxu0 %v2596
        %v2616 = vpop.f32.mrf.mxu0
        %v2617 = vadd.f32 0.0, %v2616
        %v2618 = vpop.f32.mrf.mxu0
        %v2619 = vadd.f32 0.0, %v2618
        %2620 = vmatmul.bf16.gmra.mxu0 %v2599
        %v2621 = vpop.f32.mrf.mxu0
        %v2622 = vadd.f32 0.0, %v2621
        %v2623 = vpop.f32.mrf.mxu0
        %v2624 = vadd.f32 0.0, %v2623
        %2625 = vmatmul.bf16.gmra.mxu0 %v2602
        %v2626 = vpop.f32.mrf.mxu0
        %v2627 = vadd.f32 0.0, %v2626
        %v2628 = vpop.f32.mrf.mxu0
        %v2629 = vadd.f32 0.0, %v2628
        %2630 = vmatmul.bf16.gmra.mxu0 %v2605
        %v2631 = vpop.f32.mrf.mxu0
        %v2632 = vadd.f32 0.0, %v2631
        %v2633 = vpop.f32.mrf.mxu0
        %v2634 = vadd.f32 0.0, %v2633
        %2635 = vdwg.mxu0
        %2644 = vrot.lane.b32.xlu0 %v2189, 8
        %v2645 = vpop.permute.xlu0 %2644
        %2646 = vrot.lane.b32.xlu0 %v2191, 8
        %v2647 = vpop.permute.xlu0 %2646
        %2648 = vrot.lane.b32.xlu0 %v2194, 8
        %v2649 = vpop.permute.xlu0 %2648
        %2650 = vrot.lane.b32.xlu0 %v2196, 8
        %v2651 = vpop.permute.xlu0 %2650
        %2652 = vrot.lane.b32.xlu0 %v2199, 8
        %v2653 = vpop.permute.xlu0 %2652
        %2654 = vrot.lane.b32.xlu0 %v2201, 8
        %v2655 = vpop.permute.xlu0 %2654
        %2656 = vrot.lane.b32.xlu0 %v2204, 8
        %v2657 = vpop.permute.xlu0 %2656
        %2658 = vrot.lane.b32.xlu0 %v2206, 8
        %v2659 = vpop.permute.xlu0 %2658
        %2676 = vrot.lane.b32.xlu0 %v2403, 16
        %v2677 = vpop.permute.xlu0 %2676
        %2678 = vrot.lane.b32.xlu0 %v2405, 16
        %v2679 = vpop.permute.xlu0 %2678
        %2680 = vrot.lane.b32.xlu0 %v2408, 16
        %v2681 = vpop.permute.xlu0 %2680
        %2682 = vrot.lane.b32.xlu0 %v2410, 16
        %v2683 = vpop.permute.xlu0 %2682
        %2684 = vrot.lane.b32.xlu0 %v2413, 16
        %v2685 = vpop.permute.xlu0 %2684
        %2686 = vrot.lane.b32.xlu0 %v2415, 16
        %v2687 = vpop.permute.xlu0 %2686
        %2688 = vrot.lane.b32.xlu0 %v2418, 16
        %v2689 = vpop.permute.xlu0 %2688
        %2690 = vrot.lane.b32.xlu0 %v2420, 16
        %v2691 = vpop.permute.xlu0 %2690
        %2708 = vrot.lane.b32.xlu0 %v2617, 24
        %v2709 = vpop.permute.xlu0 %2708
        %2710 = vrot.lane.b32.xlu0 %v2619, 24
        %v2711 = vpop.permute.xlu0 %2710
        %2712 = vrot.lane.b32.xlu0 %v2622, 24
        %v2713 = vpop.permute.xlu0 %2712
        %2714 = vrot.lane.b32.xlu0 %v2624, 24
        %v2715 = vpop.permute.xlu0 %2714
        %2716 = vrot.lane.b32.xlu0 %v2627, 24
        %v2717 = vpop.permute.xlu0 %2716
        %2718 = vrot.lane.b32.xlu0 %v2629, 24
        %v2719 = vpop.permute.xlu0 %2718
        %2720 = vrot.lane.b32.xlu0 %v2632, 24
        %v2721 = vpop.permute.xlu0 %2720
        %2722 = vrot.lane.b32.xlu0 %v2634, 24
        %v2723 = vpop.permute.xlu0 %2722
        %v2732 = vsel %vm816, %v1975, %v2645
        %v2733 = vsel %vm816, %v1977, %v2647
        %v2734 = vsel %vm816, %v1980, %v2649
        %v2735 = vsel %vm816, %v1982, %v2651
        %v2736 = vsel %vm816, %v1985, %v2653
        %v2737 = vsel %vm816, %v1987, %v2655
        %v2738 = vsel %vm816, %v1990, %v2657
        %v2739 = vsel %vm816, %v1992, %v2659
        %v2740 = vsel %vm1762, %v2732, %v2677
        %v2741 = vsel %vm1762, %v2733, %v2679
        %v2742 = vsel %vm1762, %v2734, %v2681
        %v2743 = vsel %vm1762, %v2735, %v2683
        %v2744 = vsel %vm1762, %v2736, %v2685
        %v2745 = vsel %vm1762, %v2737, %v2687
        %v2746 = vsel %vm1762, %v2738, %v2689
        %v2747 = vsel %vm1762, %v2739, %v2691
        %v2748 = vsel %vm1771, %v2740, %v2709
        %v2749 = vsel %vm1771, %v2741, %v2711
        %v2750 = vsel %vm1771, %v2742, %v2713
        %v2751 = vsel %vm1771, %v2743, %v2715
        %v2752 = vsel %vm1771, %v2744, %v2717
        %v2753 = vsel %vm1771, %v2745, %v2719
        %v2754 = vsel %vm1771, %v2746, %v2721
        %v2755 = vsel %vm1771, %v2747, %v2723
        %v2756 = vpack.c.bf16 %v1773, %v1772
        %v2757 = vpack.c.bf16 %v1775, %v1774
        %v2758 = vpack.c.bf16 %v1777, %v1776
        %v2759 = vpack.c.bf16 %v1779, %v1778
        %v2760 = vpack.c.bf16 %v2749, %v2748
        %v2761 = vpack.c.bf16 %v2751, %v2750
        %v2762 = vpack.c.bf16 %v2753, %v2752
        %v2763 = vpack.c.bf16 %v2755, %v2754
        %v2764 = vld [vmem:[#allocation7] sm:$0xf]
        %v2765 = vld [vmem:[#allocation7 + $0x4] sm:$0xf]
        %v2766 = vld [vmem:[#allocation7 + $0x8] sm:$0xf]
        %v2767 = vld [vmem:[#allocation7 + $0xc] sm:$0xf]
        %v2768 = vld [vmem:[%s4] sm:$0x1]
        %v2770 = vperm.slane %v2768, 0
        %v2776 = vunpack.c.l.b16 %v2764
        %v2777 = vunpack.c.l.b16 %v2765
        %v2778 = vunpack.c.l.b16 %v2766
        %v2779 = vunpack.c.l.b16 %v2767
        %v2780 = vpack.c.b16 %v2777, %v2776
        %v2781 = vpack.c.b16 %v2779, %v2778
        %v2785 = vsel %vm339, %v2756, 0
        %v2788 = vsel %vm339, %v2757, 0
        %v2791 = vsel %vm339, %v2758, 0
        %v2794 = vsel %vm339, %v2759, 0
        %v2797 = vsel %vm339, %v2760, 0
        %v2800 = vsel %vm339, %v2761, 0
        %v2803 = vsel %vm339, %v2762, 0
        %v2806 = vsel %vm339, %v2763, 0
        %2808 = vmatpush.bf16.msra.mxu0 0
        %2809 = vmatpush.bf16.msra.mxu0 0
        %2810 = vmatpush.bf16.msra.mxu0 0
        %2811 = vmatpush.bf16.msra.mxu0 0
        %2812 = vmatpush.bf16.msra.mxu0 0
        %2813 = vmatpush.bf16.msra.mxu0 0
        %2814 = vmatpush.bf16.msra.mxu0 %v2781
        %2815 = vmatpush.bf16.msra.mxu0 %v2780
        %2816 = vmatmul.bf16.gmra.mxu0 %v2785
        %v2817 = vpop.f32.mrf.mxu0
        %v2818 = vadd.f32 %v2770, %v2817
        %v2819 = vpop.f32.mrf.mxu0
        %v2820 = vadd.f32 %v2770, %v2819
        %2821 = vmatmul.bf16.gmra.mxu0 %v2788
        %v2822 = vpop.f32.mrf.mxu0
        %v2823 = vadd.f32 %v2770, %v2822
        %v2824 = vpop.f32.mrf.mxu0
        %v2825 = vadd.f32 %v2770, %v2824
        %2826 = vmatmul.bf16.gmra.mxu0 %v2791
        %v2827 = vpop.f32.mrf.mxu0
        %v2828 = vadd.f32 %v2770, %v2827
        %v2829 = vpop.f32.mrf.mxu0
        %v2830 = vadd.f32 %v2770, %v2829
        %2831 = vmatmul.bf16.gmra.mxu0 %v2794
        %v2832 = vpop.f32.mrf.mxu0
        %v2833 = vadd.f32 %v2770, %v2832
        %v2834 = vpop.f32.mrf.mxu0
        %v2835 = vadd.f32 %v2770, %v2834
        %2836 = vmatmul.bf16.gmra.mxu0 %v2797
        %v2837 = vpop.f32.mrf.mxu0
        %v2838 = vadd.f32 %v2770, %v2837
        %v2839 = vpop.f32.mrf.mxu0
        %v2840 = vadd.f32 %v2770, %v2839
        %2841 = vmatmul.bf16.gmra.mxu0 %v2800
        %v2842 = vpop.f32.mrf.mxu0
        %v2843 = vadd.f32 %v2770, %v2842
        %v2844 = vpop.f32.mrf.mxu0
        %v2845 = vadd.f32 %v2770, %v2844
        %2846 = vmatmul.bf16.gmra.mxu0 %v2803
        %v2847 = vpop.f32.mrf.mxu0
        %v2848 = vadd.f32 %v2770, %v2847
        %v2849 = vpop.f32.mrf.mxu0
        %v2850 = vadd.f32 %v2770, %v2849
        %2851 = vmatmul.bf16.gmra.mxu0 %v2806
        %v2852 = vpop.f32.mrf.mxu0
        %v2853 = vadd.f32 %v2770, %v2852
        %v2854 = vpop.f32.mrf.mxu0
        %v2855 = vadd.f32 %v2770, %v2854
        %2856 = vdwg.mxu0
        %2858 = vrot.lane.b32.xlu0 %v2820, 32
        %v2859 = vpop.permute.xlu0 %2858
        %2862 = vrot.lane.b32.xlu0 %v2823, 64
        %v2863 = vpop.permute.xlu0 %2862
        %2866 = vrot.lane.b32.xlu0 %v2825, 96
        %v2867 = vpop.permute.xlu0 %2866
        %2870 = vrot.lane.b32.xlu0 %v2830, 32
        %v2871 = vpop.permute.xlu0 %2870
        %2874 = vrot.lane.b32.xlu0 %v2833, 64
        %v2875 = vpop.permute.xlu0 %2874
        %2878 = vrot.lane.b32.xlu0 %v2835, 96
        %v2879 = vpop.permute.xlu0 %2878
        %2882 = vrot.lane.b32.xlu0 %v2840, 32
        %v2883 = vpop.permute.xlu0 %2882
        %2886 = vrot.lane.b32.xlu0 %v2843, 64
        %v2887 = vpop.permute.xlu0 %2886
        %2890 = vrot.lane.b32.xlu0 %v2845, 96
        %v2891 = vpop.permute.xlu0 %2890
        %2894 = vrot.lane.b32.xlu0 %v2850, 32
        %v2895 = vpop.permute.xlu0 %2894
        %2898 = vrot.lane.b32.xlu0 %v2853, 64
        %v2899 = vpop.permute.xlu0 %2898
        %2902 = vrot.lane.b32.xlu0 %v2855, 96
        %v2903 = vpop.permute.xlu0 %2902
        %v2905 = vsel %vm339, %v2818, %v2859
        %v2906 = vsel %vm870, %v2905, %v2863
        %vm2907 = vcmask 785408
        %v2908 = vsel %vm2907, %v2906, %v2867
        %v2909 = vsel %vm339, %v2828, %v2871
        %v2910 = vsel %vm870, %v2909, %v2875
        %v2911 = vsel %vm2907, %v2910, %v2879
        %v2912 = vsel %vm339, %v2838, %v2883
        %v2913 = vsel %vm870, %v2912, %v2887
        %v2914 = vsel %vm2907, %v2913, %v2891
        %v2915 = vsel %vm339, %v2848, %v2895
        %v2916 = vsel %vm870, %v2915, %v2899
        %v2917 = vsel %vm2907, %v2916, %v2903
        %2918 = vst [vmem:[%s293] sm:$0xff] %v2908
        %2919 = vst [vmem:[%s293 + $0x8] sm:$0xff] %v2911
        %2920 = vst [vmem:[%s293 + $0x10] sm:$0xff] %v2914
        %2921 = vst [vmem:[%s293 + $0x18] sm:$0xff] %v2917
        %s2922 = sand.u32 %s157, 1
        %s2923 = scalar_lea.sflag [#allocation4], %s2922
        %s2924 = sand.u32 %s157, 1
        %s2925 = smul.addr %s2924, 32
        %s2926 = scalar_lea.vmem [#allocation8], %s2925
        // Predicated region
        $region53: #{tpu_custom_call.1} parent=39 // pred_check
          %p2927 = pneg %p167
        $region54: #{tpu_custom_call.1} parent=39 // pred_check_branch
          %2929 = sbr.rel (%p2927) target = $region56
        $region55: #{tpu_custom_call.1} parent=39 // pred_region
          %2931 = vsyncadd %s2923, 0
          %s2932 = smul.addr %s28, 4
          %s2933 = smul.addr %s27, 8
          %s2934 = sadd.s32 %s2932, %s2933
          %s2935 = smul.addr %s2934, 8
          %s2936 = scalar_lea.hbm %s5, %s2935
          %s2938 = sshll.u32 %s2926, 4
          %s2939 = int_to_ptr.vmem [resolvable:$true] %s2938
          %s2940 = sshll.u32 %s2936, 4
          %s2941 = int_to_ptr.hbm [resolvable:$true] %s2940
          %2943 = dma.vmem_to_hbm [thread:$0]  %s2939, 512, %s2941, %s2923
        $region56: #{tpu_custom_call.1} parent=39 // pred_fallthru
          _
      $region40: #{tpu_custom_call.1} parent=5 // pred_fallthru
        _
      %p2944 = scmp.le.s32.totalorder 2, %s18
      // Predicated region
      $region57: #{tpu_custom_call.1} parent=5 // pred_check
        %p2945 = pneg %p2944
      $region58: #{tpu_custom_call.1} parent=5 // pred_check_branch
        %2947 = sbr.rel (%p2945) target = $region60
      $region59: #{tpu_custom_call.1} parent=5 // pred_region
        %s2948 = ssub.s32 %s18, 2
        // Predicated region
        $region61: #{tpu_custom_call.1} parent=59 // pred_check
          %p2949 = pneg %p173
        $region62: #{tpu_custom_call.1} parent=59 // pred_check_branch
          %2951 = sbr.rel (%p2949) target = $region64
        $region63: #{tpu_custom_call.1} parent=59 // pred_region
          %s2952 = sand.u32 %s158, 1
          %s2953 = scalar_lea.sflag [#allocation4], %s2952
          %s2954 = sand.u32 %s158, 1
          %s2955 = smul.addr %s2954, 32
          %s2956 = scalar_lea.vmem [#allocation8], %s2955
          %2958 = dma.done %s2953, 512
        $region64: #{tpu_custom_call.1} parent=59 // pred_fallthru
          _
      $region60: #{tpu_custom_call.1} parent=5 // pred_fallthru
        _
    $region6: #{tpu_custom_call.1} parent=1 // loop_footer
      %s22 = sadd.s32 1, %s18
    $region7: #{tpu_custom_call.1} parent=1 // loop_footer_branch
      %17 = sbr.rel target = $region3
    $region8: #{tpu_custom_call.1} parent=1 // loop_exit
      _
    %2959 = vsyncpa [#allocation3], 1
    %s2960 = scalar_lea.sflag [#allocation3], 1
    %2961 = vsyncpa %s2960, 1
    %2962 = vsyncpa [#allocation6], 1
    %2963 = vsyncpa [#allocation4], 1
    %s2964 = scalar_lea.sflag [#allocation4], 1
    %2965 = vsyncpa %s2964, 1

</llo_original>
